<compile_context>
chip_gen: v6e
topology: v6e:2x2x1
jax: 0.10.0
libtpu: 0.0.40
codegen_flags: <defaults>
</compile_context>

<pallas_src>
import functools

import jax
import jax.numpy as jnp
from jax.experimental import pallas as pl
from jax.experimental.pallas import tpu as pltpu

# ----------------------------- configuration --------------------------------
IN_CHANNELS = 32
OUT_CHANNELS = 16                       # "C" (self.C) in the module
IMAGE_SIZE = (64, 64)                   # (Hi, Wi) original image size
FEATURE_SIZE = (4, 4)                   # (Hf, Wf) frustum feature size
PC_RANGE = [-8.0, -8.0, -3.0, 8.0, 8.0, 5.0]
PC_GRID = [1.0, 1.0, 8.0]
DEPTH_STEP = (1.0, 9.0, 1.0)            # dbound -> D = 8
B, N = 2, 2
HI_FEAT, WI_FEAT = IMAGE_SIZE[0] // 16, IMAGE_SIZE[1] // 16   # input feature-map dims (4, 4)

# TODO(synk): downsample > 1 branch (Conv3x3 + BN + ReLU stack) not implemented;
#             the default downsample=1 path (nn.Identity) is used here.


# ----------------------------- module setup ---------------------------------
def gen_dx_bx(xbound, ybound, zbound):
    dx = jnp.array([row[2] for row in (xbound, ybound, zbound)], jnp.float32)
    bx = jnp.array([row[0] + row[2] / 2.0 for row in (xbound, ybound, zbound)], jnp.float32)
    nx = [int((row[1] - row[0]) / row[2]) for row in (xbound, ybound, zbound)]
    return dx, bx, nx


def create_frustum(image_size, feature_size, dbound):
    Hi, Wi = image_size
    Hf, Wf = feature_size
    dmin, dmax, dstep = dbound
    D = int((dmax - dmin) / dstep)
    Df = D * Hi * Wi // (256 * Hf * Wf)
    ds = jnp.broadcast_to(
        jnp.linspace(dmin, dmax - dstep, Df, dtype=jnp.float32).reshape(Df, 1, 1), (Df, Hf, Wf))
    xs = jnp.broadcast_to(
        jnp.linspace(0.0, Wi - 1.0, Wf, dtype=jnp.float32).reshape(1, 1, Wf), (Df, Hf, Wf))
    ys = jnp.broadcast_to(
        jnp.linspace(0.0, Hi - 1.0, Hf, dtype=jnp.float32).reshape(1, Hf, 1), (Df, Hf, Wf))
    frustum = jnp.stack((xs, ys, ds), axis=-1)      # (Df, Hf, Wf, 3)
    return frustum, D


# ----------------------------- tile helpers ----------------------------------
def _pick_tile(total, cap, align=8):
    """Largest multiple of `align` that divides `total` and is <= cap (fallback: total)."""
    best = None
    t = align
    limit = min(total, cap)
    while t <= limit:
        if total % t == 0:
            best = t
        t += align
    return best if best is not None else total


def _default_tv():
    """Splat voxel tile: 256 matches the v6e/v7x MXU output width; 128 on v5e."""
    try:
        kind = jax.devices()[0].device_kind.lower()
    except Exception:
        return 256
    if "v5 lite" in kind or "v5e" in kind:
        return 128
    return 256


# ----------------------------- Pallas kernel 1 -------------------------------
# depthnet (fused 1x1 conv) + softmax over depth bins + depth (x) feature outer product.
# The weight's feature half is pre-tiled d-major (W_feat (x) 1_D), so the fused matmul already
# emits feat_tiled in (D*C) lane order; the depth side is expanded with one tiny constant 0/1
# matmul (E_d), and the outer product is a single lane-dense VPU multiply.
def depth_feat_kernel(a_ref, w_ref, b_ref, ed_ref, out_ref, *, d, dc):
    a = a_ref[...]                                                                  # (TP, Cin)
    # one fused matmul for (tiled) features + depth logits (single MXU push per step)
    y = jnp.dot(a, w_ref[...], preferred_element_type=jnp.float32) + b_ref[...]    # (TP, D*C + D)
    feat_x = y[:, :dc]                        # (TP, D*C)  lanes ordered d-major, c-minor
    dlogit = y[:, dc:dc + d]                  # (TP, D)    128-aligned slice start
    m = jnp.max(dlogit, axis=-1, keepdims=True)
    e = jnp.exp(dlogit - m)
    # EUP approx reciprocal keeps the softmax divide off the (binding) VALU slot
    depth = e * pl.reciprocal(jnp.sum(e, axis=-1, keepdims=True), approx=True)      # (TP, D)
    # expand depth to D*C lanes with a constant 0/1 matmul (MXU slot, no lane shuffles)
    depth_x = jnp.dot(depth, ed_ref[...], preferred_element_type=jnp.float32)       # (TP, D*C)
    out_ref[...] = depth_x * feat_x


def get_cam_feats(imgs, w, bias, D, C):
    """imgs: (B, N, Cin, H, W) NCHW.

    Returns a (P, D*C) float32 array with rows ordered (B, N, H, W) and lanes ordered
    (d-major, c-minor) -- i.e. a pure reshape away from (B, N, H, W, D, C)."""
    Bq, Nq, Cin, H, W = imgs.shape
    P = Bq * Nq * H * W
    DC = D * C
    a = jnp.transpose(imgs, (0, 1, 3, 4, 2)).reshape(P, Cin)          # pixels x channels

    w_mat = w[:, :, 0, 0].T                                           # (Cin, D + C)
    w_depth, w_feat = w_mat[:, :D], w_mat[:, D:]
    b_depth, b_feat = bias[:D], bias[D:]
    # fused weight: [ W_feat tiled D times | W_depth ]  ->  (Cin, D*C + D)
    w_fused = jnp.concatenate([jnp.tile(w_feat, (1, D)), w_depth], axis=1)
    b_fused = jnp.concatenate([jnp.tile(b_feat, D), b_depth]).reshape(1, DC + D)
    # E_d[d, d*C + c] = 1   (depth lane-expansion matrix)
    ed = jnp.kron(jnp.eye(D, dtype=jnp.float32), jnp.ones((1, C), jnp.float32))     # (D, D*C)

    TP = _pick_tile(P, 1024)      # big row tiles amortize the ~0.35us per-grid-step overhead
    out = pl.pallas_call(
        functools.partial(depth_feat_kernel, d=D, dc=DC),
        out_shape=jax.ShapeDtypeStruct((P, DC), jnp.float32),
        grid_spec=pltpu.PrefetchScalarGridSpec(
            num_scalar_prefetch=0,
            grid=(P // TP,),
            in_specs=[
                pl.BlockSpec((TP, Cin), lambda i: (i, 0)),
                pl.BlockSpec((Cin, DC + D), lambda i: (0, 0)),
                pl.BlockSpec((1, DC + D), lambda i: (0, 0)),
                pl.BlockSpec((D, DC), lambda i: (0, 0)),
            ],
            out_specs=pl.BlockSpec((TP, DC), lambda i: (i, 0)),
        ),
        compiler_params=pltpu.CompilerParams(dimension_semantics=("parallel",)),
    )(a, w_fused, b_fused, ed)
    return out


# ----------------------------- Pallas kernel 2 -------------------------------
# bev_pool "splat": scatter-add features into the BEV voxel grid, expressed as
#   out[c, v] = sum_n featsT[c, n] * 1[vox[n] == v]       (one-hot matmul on the MXU)
# with a channel-major (C, n_vox) accumulator so the accumulate/store is 256-lane dense.
def splat_kernel(vox_ref, featsT_ref, out_ref, *, tv, kc):
    p = pl.program_id(1)

    @pl.when(p == 0)
    def _():
        out_ref[...] = jnp.zeros_like(out_ref)

    v0 = pl.program_id(0) * tv
    tpn = vox_ref.shape[0]
    # voxel ids for this output tile; depends only on program_id(0) -> hoisted out of the
    # chunk loop below (and effectively out of the p loop, which is tiny at these sizes).
    vids = v0 + jax.lax.broadcasted_iota(jnp.int32, (kc, tv), 1)          # (KC, TV)
    acc = jnp.zeros(out_ref.shape, jnp.float32)                           # (C, TV)
    for k0 in range(0, tpn, kc):          # static unroll; bounds one-hot vreg pressure
        # dropped points carry vox = -1 and never match (vids >= 0)
        onehot = (vox_ref[k0:k0 + kc, :] == vids).astype(jnp.float32)     # (KC, TV)
        acc = acc + jnp.dot(featsT_ref[:, k0:k0 + kc], onehot,
                            preferred_element_type=jnp.float32)           # (C, TV)
    out_ref[...] += acc


def bev_splat(featsT, vox, n_vox, C):
    """featsT: (C, NP) float32 channel-major features; vox: (NP,) int32 flat voxel id (-1 = drop).
    Returns (C, n_vox) float32 scatter-add of features into BEV voxels."""
    # TODO(synk): for production LSS sizes (NP ~ 1e6, n_vox ~ 1e5), replace this dense
    #             one-hot matmul with a sorted-point / scalar-prefetch formulation
    #             (PrefetchScalarGridSpec + data-dependent index_map) so total work is O(NP*C).
    NP = featsT.shape[1]
    TV = _default_tv()
    TPN, KC = 512, 128
    np_pad = pl.cdiv(NP, TPN) * TPN
    nv_pad = pl.cdiv(n_vox, TV) * TV
    if np_pad != NP:                                   # tail padding: never assumes divisibility
        featsT = jnp.pad(featsT, ((0, 0), (0, np_pad - NP)))
        vox = jnp.pad(vox, (0, np_pad - NP), constant_values=-1)

    out = pl.pallas_call(
        functools.partial(splat_kernel, tv=TV, kc=KC),
        out_shape=jax.ShapeDtypeStruct((C, nv_pad), jnp.float32),
        grid_spec=pltpu.PrefetchScalarGridSpec(
            num_scalar_prefetch=0,
            grid=(nv_pad // TV, np_pad // TPN),        # reduction (points) axis last
            in_specs=[
                pl.BlockSpec((TPN, 1), lambda v, p: (p, 0)),   # voxel ids, sublane-major
                pl.BlockSpec((C, TPN), lambda v, p: (0, p)),   # features, channel-major (lane dense)
            ],
            out_specs=pl.BlockSpec((C, TV), lambda v, p: (0, v)),
        ),
        compiler_params=pltpu.CompilerParams(dimension_semantics=("parallel", "arbitrary")),
    )(vox.reshape(np_pad, 1), featsT)
    return out[:, :n_vox]


# ----------------------------- plain-JAX glue --------------------------------
def get_geometry(frustum, c2l_rots, c2l_trans, intrins, post_rots, post_trans):
    # frustum: (Df, Hf, Wf, 3); matrices: (B, N, 3, 3); trans: (B, N, 3)
    points = frustum[None, None] - post_trans[:, :, None, None, None, :]
    points = jnp.einsum('bnij,bndhwj->bndhwi', jnp.linalg.inv(post_rots), points)
    points = jnp.concatenate([points[..., :2] * points[..., 2:3], points[..., 2:3]], axis=-1)
    combine = jnp.einsum('bnij,bnjk->bnik', c2l_rots, jnp.linalg.inv(intrins))
    points = jnp.einsum('bnij,bndhwj->bndhwi', combine, points)
    points = points + c2l_trans[:, :, None, None, None, :]
    return points                                                     # (B, N, Df, Hf, Wf, 3)


def lss_forward(imgs, geometries, params, consts):
    intrins = geometries['camera_intrinsics'][..., :3, :3]
    post_rots = geometries['img_aug_matrix'][..., :3, :3]
    post_trans = geometries['img_aug_matrix'][..., :3, 3]
    c2l_rots = geometries['camera2lidar'][..., :3, :3]
    c2l_trans = geometries['camera2lidar'][..., :3, 3]

    D, C = consts['D'], consts['C']
    geom = get_geometry(consts['frustum'], c2l_rots, c2l_trans, intrins, post_rots, post_trans)
    x2d = get_cam_feats(imgs, params['w'], params['b'], D, C)         # (P, D*C)

    # ---- bev_pool ----
    Bq, Nq, _, H, W = imgs.shape
    Nprime = Bq * Nq * H * W * D

    # feats is a pure reshape of the kernel output (no HBM activation transpose between the
    # kernels); the small geometry tensor is reordered to the matching (B, N, H, W, D) order.
    feats = x2d.reshape(Nprime, C)
    g = jnp.transpose(geom, (0, 1, 3, 4, 2, 5)).reshape(Nprime, 3)

    dx, bx = consts['dx'], consts['bx']
    nx0, nx1, nx2 = consts['nx']
    gidx = ((g - (bx - dx / 2.0)) / dx).astype(jnp.int32)             # trunc-toward-zero == torch .long()
    batch_ix = jnp.repeat(jnp.arange(Bq, dtype=jnp.int32), Nprime // Bq)

    kept = ((gidx[:, 0] >= 0) & (gidx[:, 0] < nx0) &
            (gidx[:, 1] >= 0) & (gidx[:, 1] < nx1) &
            (gidx[:, 2] >= 0) & (gidx[:, 2] < nx2))

    # flattened voxel index into (B, Z, X, Y); dropped points -> -1 (never matched by the kernel)
    vox = batch_ix * (nx2 * nx0 * nx1) + gidx[:, 2] * (nx0 * nx1) + gidx[:, 0] * nx1 + gidx[:, 1]
    vox = jnp.where(kept, vox, -1).astype(jnp.int32)
    featsT = jnp.where(kept[None, :], feats.T, 0.0)                   # (C, Nprime) channel-major

    n_vox = Bq * nx2 * nx0 * nx1
    pooledT = bev_splat(featsT, vox, n_vox, C)                        # (C, B*Z*X*Y)

    bev = pooledT.reshape(C, Bq, nx2, nx0, nx1)                       # (C, B, Z, X, Y)
    bev = bev.transpose(1, 0, 2, 3, 4)                                # (B, C, Z, X, Y)
    bev = bev.transpose(0, 1, 2, 4, 3)                                # (B, C, Z, Y, X)  (torch .transpose(-2,-1))
    bev = bev.transpose(0, 2, 1, 3, 4).reshape(Bq, nx2 * C, nx1, nx0)  # cat(unbind(dim=2), 1)
    return bev                                                        # downsample == Identity


# ----------------------------- main ------------------------------------------
if __name__ == "__main__":
    frustum, D = create_frustum(IMAGE_SIZE, FEATURE_SIZE, DEPTH_STEP)
    dx, bx, nx = gen_dx_bx(
        (PC_RANGE[0], PC_RANGE[3], PC_GRID[0]),
        (PC_RANGE[1], PC_RANGE[4], PC_GRID[1]),
        (PC_RANGE[2], PC_RANGE[5], PC_GRID[2]),
    )
    consts = dict(frustum=frustum, D=D, C=OUT_CHANNELS, dx=dx, bx=bx, nx=nx)

    key = jax.random.PRNGKey(0)
    k_img, k_w, k_b, k_r1, k_t1, k_r2, k_t2 = jax.random.split(key, 7)

    imgs = jax.random.normal(k_img, (B, N, IN_CHANNELS, HI_FEAT, WI_FEAT), jnp.float32)

    # depthnet = Conv2d(in_channels, D + C, kernel_size=1)
    w = 0.1 * jax.random.normal(k_w, (D + OUT_CHANNELS, IN_CHANNELS, 1, 1), jnp.float32)
    b = 0.01 * jax.random.normal(k_b, (D + OUT_CHANNELS,), jnp.float32)
    params = dict(w=w, b=b)

    eye4 = jnp.broadcast_to(jnp.eye(4, dtype=jnp.float32), (B, N, 4, 4))
    cam2lidar = eye4
    cam2lidar = cam2lidar.at[..., :3, :3].add(0.05 * jax.random.normal(k_r1, (B, N, 3, 3), jnp.float32))
    cam2lidar = cam2lidar.at[..., :3, 3].set(
        jax.random.uniform(k_t1, (B, N, 3), jnp.float32, -1.0, 1.0))

    intr = jnp.eye(4, dtype=jnp.float32)
    intr = intr.at[0, 0].set(40.0).at[1, 1].set(40.0).at[0, 2].set(32.0).at[1, 2].set(32.0)
    intrinsics = jnp.broadcast_to(intr, (B, N, 4, 4))

    img_aug = eye4
    img_aug = img_aug.at[..., :3, :3].add(0.02 * jax.random.normal(k_r2, (B, N, 3, 3), jnp.float32))
    img_aug = img_aug.at[..., :3, 3].set(0.5 * jax.random.normal(k_t2, (B, N, 3), jnp.float32))

    geometries = dict(camera2lidar=cam2lidar, camera_intrinsics=intrinsics, img_aug_matrix=img_aug)

    fwd = jax.jit(lambda imgs_, geoms_, params_: lss_forward(imgs_, geoms_, params_, consts))
    out = fwd(imgs, geometries, params)
    jax.block_until_ready(out)
    assert out.shape == (B, nx[2] * OUT_CHANNELS, nx[1], nx[0]), out.shape
    print("KERNEL_OK")
</pallas_src>

<mosaic_0001>
module attributes {stable_mosaic.version = 11 : i64} {
  func.func @depth_feat_kernel(%arg0: i32, %arg1: memref<64x32xf32, #tpu.memory_space<vmem>>, %arg2: memref<32x136xf32, #tpu.memory_space<vmem>>, %arg3: memref<1x136xf32, #tpu.memory_space<vmem>>, %arg4: memref<8x128xf32, #tpu.memory_space<vmem>>, %arg5: memref<64x128xf32, #tpu.memory_space<vmem>>) attributes {dimension_semantics = [#tpu.dimension_semantics<parallel>], iteration_bounds = array<i64: 1>, scalar_prefetch = 0 : i64, scratch_operands = 0 : i64, tpu.core_type = #tpu.core_type<tc>, window_params = [{transform_indices = @transform_0, window_bounds = array<i64: 64, 32>}, {pipeline_mode = #tpu.pipeline_mode<synchronous>, transform_indices = @transform_1, window_bounds = array<i64: 32, 136>}, {pipeline_mode = #tpu.pipeline_mode<synchronous>, transform_indices = @transform_2, window_bounds = array<i64: 1, 136>}, {pipeline_mode = #tpu.pipeline_mode<synchronous>, transform_indices = @transform_3, window_bounds = array<i64: 8, 128>}, {transform_indices = @transform_4, window_bounds = array<i64: 64, 128>}]} {
    %c0 = arith.constant 0 : index
    %c0_0 = arith.constant 0 : index
    %0 = vector.load %arg1[%c0, %c0_0] : memref<64x32xf32, #tpu.memory_space<vmem>>, vector<64x32xf32>
    %c0_1 = arith.constant 0 : index
    %c0_2 = arith.constant 0 : index
    %1 = vector.load %arg2[%c0_1, %c0_2] : memref<32x136xf32, #tpu.memory_space<vmem>>, vector<32x136xf32>
    %cst = arith.constant dense<0.000000e+00> : vector<64x136xf32>
    %2 = tpu.matmul %0, %1, %cst {dimension_numbers = #tpu.dot_dimension_numbers<[1], [0], [0], [1], [0, 0, 1, 1], [], []>} : vector<64x32xf32>, vector<32x136xf32>, vector<64x136xf32> -> vector<64x136xf32>
    %c0_3 = arith.constant 0 : index
    %c0_4 = arith.constant 0 : index
    %3 = vector.load %arg3[%c0_3, %c0_4] : memref<1x136xf32, #tpu.memory_space<vmem>>, vector<1x136xf32>
    %4 = vector.broadcast %3 : vector<1x136xf32> to vector<64x136xf32>
    %5 = arith.addf %2, %4 : vector<64x136xf32>
    %6 = vector.extract_strided_slice %5 {offsets = [0, 0], sizes = [64, 128], strides = [1, 1]} : vector<64x136xf32> to vector<64x128xf32>
    %7 = vector.extract_strided_slice %5 {offsets = [0, 128], sizes = [64, 8], strides = [1, 1]} : vector<64x136xf32> to vector<64x8xf32>
    %cst_5 = arith.constant dense<0xFF800000> : vector<64xf32>
    %8 = vector.multi_reduction <maximumf>, %7, %cst_5 [1] : vector<64x8xf32> to vector<64xf32>
    %9 = vector.shape_cast %8 : vector<64xf32> to vector<64x1xf32>
    %10 = vector.broadcast %9 : vector<64x1xf32> to vector<64x8xf32>
    %11 = arith.subf %7, %10 : vector<64x8xf32>
    %12 = math.exp %11 : vector<64x8xf32>
    %cst_6 = arith.constant dense<0.000000e+00> : vector<64xf32>
    %13 = vector.multi_reduction <add>, %12, %cst_6 [1] : vector<64x8xf32> to vector<64xf32>
    %14 = vector.shape_cast %13 : vector<64xf32> to vector<64x1xf32>
    %15 = tpu.reciprocal %14 {approx = true} : vector<64x1xf32> -> vector<64x1xf32>
    %16 = vector.broadcast %15 : vector<64x1xf32> to vector<64x8xf32>
    %17 = arith.mulf %12, %16 : vector<64x8xf32>
    %c0_7 = arith.constant 0 : index
    %c0_8 = arith.constant 0 : index
    %18 = vector.load %arg4[%c0_7, %c0_8] : memref<8x128xf32, #tpu.memory_space<vmem>>, vector<8x128xf32>
    %cst_9 = arith.constant dense<0.000000e+00> : vector<64x128xf32>
    %19 = tpu.matmul %17, %18, %cst_9 {dimension_numbers = #tpu.dot_dimension_numbers<[1], [0], [0], [1], [0, 0, 1, 1], [], []>} : vector<64x8xf32>, vector<8x128xf32>, vector<64x128xf32> -> vector<64x128xf32>
    %20 = arith.mulf %19, %6 : vector<64x128xf32>
    %c0_10 = arith.constant 0 : index
    %c0_11 = arith.constant 0 : index
    %21 = vector.load %arg5[%c0_10, %c0_11] : memref<64x128xf32, #tpu.memory_space<vmem>>, vector<64x128xf32>
    tpu.vector_store %arg5[%c0_10, %c0_11], %20 {strides = array<i32>} : memref<64x128xf32, #tpu.memory_space<vmem>>, vector<64x128xf32>,
    return
  }
  func.func @transform_0(%arg0: i32) -> (i32, i32) {
    %c0_i32 = arith.constant 0 : i32
    %c0_i32_0 = arith.constant 0 : i32
    return %arg0, %c0_i32 : i32, i32
  }
  func.func @transform_1(%arg0: i32) -> (i32, i32) {
    %c0_i32 = arith.constant 0 : i32
    %c0_i32_0 = arith.constant 0 : i32
    %c0_i32_1 = arith.constant 0 : i32
    return %c0_i32, %c0_i32_0 : i32, i32
  }
  func.func @transform_2(%arg0: i32) -> (i32, i32) {
    %c0_i32 = arith.constant 0 : i32
    %c0_i32_0 = arith.constant 0 : i32
    %c0_i32_1 = arith.constant 0 : i32
    return %c0_i32, %c0_i32_0 : i32, i32
  }
  func.func @transform_3(%arg0: i32) -> (i32, i32) {
    %c0_i32 = arith.constant 0 : i32
    %c0_i32_0 = arith.constant 0 : i32
    %c0_i32_1 = arith.constant 0 : i32
    return %c0_i32, %c0_i32_0 : i32, i32
  }
  func.func @transform_4(%arg0: i32) -> (i32, i32) {
    %c0_i32 = arith.constant 0 : i32
    %c0_i32_0 = arith.constant 0 : i32
    return %arg0, %c0_i32 : i32, i32
  }
}

module attributes {stable_mosaic.version = 11 : i64} {
  func.func @splat_kernel(%arg0: i32, %arg1: i32, %arg2: memref<512x1xi32, #tpu.memory_space<vmem>>, %arg3: memref<16x512xf32, #tpu.memory_space<vmem>>, %arg4: memref<16x256xf32, #tpu.memory_space<vmem>>) attributes {dimension_semantics = [#tpu.dimension_semantics<parallel>, #tpu.dimension_semantics<arbitrary>], iteration_bounds = array<i64: 2, 1>, scalar_prefetch = 0 : i64, scratch_operands = 0 : i64, tpu.core_type = #tpu.core_type<tc>, window_params = [{transform_indices = @transform_0, window_bounds = array<i64: 512, 1>}, {transform_indices = @transform_1, window_bounds = array<i64: 16, 512>}, {transform_indices = @transform_2, window_bounds = array<i64: 16, 256>}]} {
    %c0_i32 = arith.constant 0 : i32
    %0 = arith.cmpi eq, %arg1, %c0_i32 : i32
    %1 = arith.extui %0 : i1 to i32
    %c0_i32_0 = arith.constant 0 : i32
    %2 = arith.cmpi ne, %1, %c0_i32_0 : i32
    scf.if %2 {
      %cst_21 = arith.constant 0.000000e+00 : f32
      %43 = vector.broadcast %cst_21 : f32 to vector<16x256xf32>
      %c0_22 = arith.constant 0 : index
      %c0_23 = arith.constant 0 : index
      %44 = vector.load %arg4[%c0_22, %c0_23] : memref<16x256xf32, #tpu.memory_space<vmem>>, vector<16x256xf32>
      tpu.vector_store %arg4[%c0_22, %c0_23], %43 {strides = array<i32>} : memref<16x256xf32, #tpu.memory_space<vmem>>, vector<16x256xf32>,
    } else {
    }
    %c256_i32 = arith.constant 256 : i32
    %3 = arith.muli %arg0, %c256_i32 : i32
    %4 = tpu.iota {dimensions = array<i32: 1>} : vector<128x256xi32>
    %5 = vector.broadcast %3 : i32 to vector<128x256xi32>
    %6 = arith.addi %5, %4 : vector<128x256xi32>
    %cst = arith.constant 0.000000e+00 : f32
    %7 = vector.broadcast %cst : f32 to vector<16x256xf32>
    %c0 = arith.constant 0 : index
    %c0_1 = arith.constant 0 : index
    %8 = vector.load %arg2[%c0, %c0_1] : memref<512x1xi32, #tpu.memory_space<vmem>>, vector<128x1xi32>
    %9 = vector.broadcast %8 : vector<128x1xi32> to vector<128x256xi32>
    %10 = arith.cmpi eq, %9, %6 : vector<128x256xi32>
    %11 = arith.extui %10 : vector<128x256xi1> to vector<128x256xi32>
    %12 = arith.sitofp %11 : vector<128x256xi32> to vector<128x256xf32>
    %c0_2 = arith.constant 0 : index
    %c0_3 = arith.constant 0 : index
    %13 = vector.load %arg3[%c0_2, %c0_3] : memref<16x512xf32, #tpu.memory_space<vmem>>, vector<16x128xf32>
    %cst_4 = arith.constant dense<0.000000e+00> : vector<16x256xf32>
    %14 = tpu.matmul %13, %12, %cst_4 {dimension_numbers = #tpu.dot_dimension_numbers<[1], [0], [0], [1], [0, 0, 1, 1], [], []>} : vector<16x128xf32>, vector<128x256xf32>, vector<16x256xf32> -> vector<16x256xf32>
    %15 = arith.addf %7, %14 : vector<16x256xf32>
    %c128 = arith.constant 128 : index
    %c0_5 = arith.constant 0 : index
    %16 = vector.load %arg2[%c128, %c0_5] : memref<512x1xi32, #tpu.memory_space<vmem>>, vector<128x1xi32>
    %17 = vector.broadcast %16 : vector<128x1xi32> to vector<128x256xi32>
    %18 = arith.cmpi eq, %17, %6 : vector<128x256xi32>
    %19 = arith.extui %18 : vector<128x256xi1> to vector<128x256xi32>
    %20 = arith.sitofp %19 : vector<128x256xi32> to vector<128x256xf32>
    %c0_6 = arith.constant 0 : index
    %c128_7 = arith.constant 128 : index
    %21 = vector.load %arg3[%c0_6, %c128_7] : memref<16x512xf32, #tpu.memory_space<vmem>>, vector<16x128xf32>
    %cst_8 = arith.constant dense<0.000000e+00> : vector<16x256xf32>
    %22 = tpu.matmul %21, %20, %cst_8 {dimension_numbers = #tpu.dot_dimension_numbers<[1], [0], [0], [1], [0, 0, 1, 1], [], []>} : vector<16x128xf32>, vector<128x256xf32>, vector<16x256xf32> -> vector<16x256xf32>
    %23 = arith.addf %15, %22 : vector<16x256xf32>
    %c256 = arith.constant 256 : index
    %c0_9 = arith.constant 0 : index
    %24 = vector.load %arg2[%c256, %c0_9] : memref<512x1xi32, #tpu.memory_space<vmem>>, vector<128x1xi32>
    %25 = vector.broadcast %24 : vector<128x1xi32> to vector<128x256xi32>
    %26 = arith.cmpi eq, %25, %6 : vector<128x256xi32>
    %27 = arith.extui %26 : vector<128x256xi1> to vector<128x256xi32>
    %28 = arith.sitofp %27 : vector<128x256xi32> to vector<128x256xf32>
    %c0_10 = arith.constant 0 : index
    %c256_11 = arith.constant 256 : index
    %29 = vector.load %arg3[%c0_10, %c256_11] : memref<16x512xf32, #tpu.memory_space<vmem>>, vector<16x128xf32>
    %cst_12 = arith.constant dense<0.000000e+00> : vector<16x256xf32>
    %30 = tpu.matmul %29, %28, %cst_12 {dimension_numbers = #tpu.dot_dimension_numbers<[1], [0], [0], [1], [0, 0, 1, 1], [], []>} : vector<16x128xf32>, vector<128x256xf32>, vector<16x256xf32> -> vector<16x256xf32>
    %31 = arith.addf %23, %30 : vector<16x256xf32>
    %c384 = arith.constant 384 : index
    %c0_13 = arith.constant 0 : index
    %32 = vector.load %arg2[%c384, %c0_13] : memref<512x1xi32, #tpu.memory_space<vmem>>, vector<128x1xi32>
    %33 = vector.broadcast %32 : vector<128x1xi32> to vector<128x256xi32>
    %34 = arith.cmpi eq, %33, %6 : vector<128x256xi32>
    %35 = arith.extui %34 : vector<128x256xi1> to vector<128x256xi32>
    %36 = arith.sitofp %35 : vector<128x256xi32> to vector<128x256xf32>
    %c0_14 = arith.constant 0 : index
    %c384_15 = arith.constant 384 : index
    %37 = vector.load %arg3[%c0_14, %c384_15] : memref<16x512xf32, #tpu.memory_space<vmem>>, vector<16x128xf32>
    %cst_16 = arith.constant dense<0.000000e+00> : vector<16x256xf32>
    %38 = tpu.matmul %37, %36, %cst_16 {dimension_numbers = #tpu.dot_dimension_numbers<[1], [0], [0], [1], [0, 0, 1, 1], [], []>} : vector<16x128xf32>, vector<128x256xf32>, vector<16x256xf32> -> vector<16x256xf32>
    %39 = arith.addf %31, %38 : vector<16x256xf32>
    %c0_17 = arith.constant 0 : index
    %c0_18 = arith.constant 0 : index
    %40 = vector.load %arg4[%c0_17, %c0_18] : memref<16x256xf32, #tpu.memory_space<vmem>>, vector<16x256xf32>
    %41 = arith.addf %40, %39 : vector<16x256xf32>
    %c0_19 = arith.constant 0 : index
    %c0_20 = arith.constant 0 : index
    %42 = vector.load %arg4[%c0_19, %c0_20] : memref<16x256xf32, #tpu.memory_space<vmem>>, vector<16x256xf32>
    tpu.vector_store %arg4[%c0_19, %c0_20], %41 {strides = array<i32>} : memref<16x256xf32, #tpu.memory_space<vmem>>, vector<16x256xf32>,
    return
  }
  func.func @transform_0(%arg0: i32, %arg1: i32) -> (i32, i32) {
    %c0_i32 = arith.constant 0 : i32
    %c0_i32_0 = arith.constant 0 : i32
    return %arg1, %c0_i32 : i32, i32
  }
  func.func @transform_1(%arg0: i32, %arg1: i32) -> (i32, i32) {
    %c0_i32 = arith.constant 0 : i32
    %c0_i32_0 = arith.constant 0 : i32
    return %c0_i32, %arg1 : i32, i32
  }
  func.func @transform_2(%arg0: i32, %arg1: i32) -> (i32, i32) {
    %c0_i32 = arith.constant 0 : i32
    %c0_i32_0 = arith.constant 0 : i32
    return %c0_i32, %arg0 : i32, i32
  }
}

</mosaic_0001>

<llo_original>
// kernel: custom-call.22
$region0: #{custom-call.22}
  %s0 = inlined_call_operand.hbm [shape: f32[2,2,3,3], index: 0, kind: input, shape index: {}]
  %s1 = inlined_call_operand.vmem [shape: f32[2,2,3,3], index: 1, kind: output, shape index: {0}]
  %s2 = inlined_call_operand.hbm [shape: s32[2,2,3], index: 2, kind: output, shape index: {1}]
  %s3 = inlined_call_operand.vmem [shape: s32[2,2,3], index: 3, kind: output, shape index: {2}]
  %4 = xla_tuple %s1, %s2, %s3
  $region1: #{custom-call.22} parent=0
    #allocation0 [shape = 'u8[4096]{0}', space=vmem, size = 0x1000, scoped, tag = 'operand span for operand 0']
    #allocation1 [shape = 'u8[4096]{0}', space=vmem, size = 0x1000, scoped, tag = 'packed  for operand 0']
    #allocation2 [shape = 's32[2]{0}', space=sflag, size = 0x8, scoped, tag = 'scoped memory for custom-call.22']
    #allocation3 [shape = 's32[2]{0}', space=sflag, size = 0x8, scoped, tag = 'scoped memory for custom-call.22']
    #allocation4 [shape = 'u8[4096]{0}', space=vmem, size = 0x1000, scoped, tag = 'operand span for operand 1']
    #allocation5 [shape = 'u8[4096]{0}', space=vmem, size = 0x1000, scoped, tag = 'packed  for operand 1']
    #allocation6 [shape = 'u8[4096]{0}', space=vmem, size = 0x1000, scoped, tag = 'operand span for operand 2']
    #allocation7 [shape = 'u8[2048]{0}', space=vmem, size = 0x800, scoped, tag = 'packed  for operand 2']
    #allocation8 [shape = 'u8[4096]{0}', space=vmem, size = 0x1000, scoped, tag = 'operand span for operand 3']
    #allocation9 [shape = 'u8[2048]{0}', space=vmem, size = 0x800, scoped, tag = 'packed  for operand 3']
    %5 = vsyncpa [#allocation2], 0
    %s6 = scalar_lea.sflag [#allocation2], 1
    %7 = vsyncpa %s6, 0
    %8 = vsyncpa [#allocation3], 0
    %s9 = scalar_lea.sflag [#allocation3], 1
    %10 = vsyncpa %s9, 0
    loop: start=0, step=1, limit=6
    $region2: #{custom-call.22} parent=1 // loop_pre_header
      _
    $region3: #{custom-call.22} parent=1 // loop_header
      %s12 = sphi 0, %s16
      %p13 = scmp.ge.s32.totalorder %s12, 6
      %s19 = sphi 0, %s31
      %s20 = sphi 0, %s27
      %s21 = sphi 0, %s19
      %s22 = sphi 0, %s20
      %s23 = sphi 0, %s21
      %s24 = sphi 0, %s22
      %s38 = sphi 0, %s40
      %s41 = sphi 0, %s38
      %s42 = sphi 0, %s41
      %s58 = sphi 0, %s42
      %s68 = sphi 0, %s70
      %s71 = sphi 0, %s68
      %s72 = sphi 0, %s71
      %s88 = sphi 0, %s72
    $region4: #{custom-call.22} parent=1 // loop_header_branch
      %15 = sbr.rel (%p13) target = $region8
    $region5: #{custom-call.22} parent=1 // loop_body
      %s17 = ssub.s32 %s12, 1
      %s18 = ssub.s32 %s12, 2
      %s25 = sadd.s32 1, %s20
      %p26 = scmp.ge.s32.totalorder %s25, 2
      %s27 = scalar_select %p26, 0, %s25
      %s28 = sadd.s32 1, %s19
      %s29 = scalar_select %p26, %s28, %s19
      %p30 = scmp.ge.s32.totalorder %s29, 2
      %s31 = scalar_select %p30, 0, %s29
      %s32 = sshrl.u32 %s20, 3
      %s33 = sshrl.u32 %s27, 3
      %s34 = ssub.s32 %s19, %s31
      %s35 = ssub.s32 %s32, %s33
      %s36 = sor.u32 %s34, %s35
      %p37 = scmp.eq.s32.totalorder %s36, 0
      %s39 = sadd.s32 %s38, 1
      %s40 = scalar_select %p37, %s38, %s39
      %p43 = pneg %p37
      %p44 = scmp.eq.s32.totalorder %s12, 3
      %p45 = por %p43, %p44
      %p46 = scmp.ne.s32.totalorder %s38, %s41
      %p47 = scmp.eq.s32.totalorder %s12, 0
      %p48 = por %p46, %p47
      %p49 = scmp.ne.s32.totalorder %s38, %s41
      %p50 = scmp.eq.s32.totalorder %s17, 3
      %p51 = por %p49, %p50
      %p52 = scmp.ne.s32.totalorder %s41, %s42
      %p53 = scmp.eq.s32.totalorder %s17, 0
      %p54 = por %p52, %p53
      %p55 = scmp.ne.s32.totalorder %s41, %s42
      %p56 = scmp.eq.s32.totalorder %s18, 3
      %p57 = por %p55, %p56
      %p59 = scmp.ne.s32.totalorder %s42, %s58
      %p60 = scmp.eq.s32.totalorder %s18, 0
      %p61 = por %p59, %p60
      %s62 = sshrl.u32 %s20, 3
      %s63 = sshrl.u32 %s27, 3
      %s64 = ssub.s32 %s19, %s31
      %s65 = ssub.s32 %s62, %s63
      %s66 = sor.u32 %s64, %s65
      %p67 = scmp.eq.s32.totalorder %s66, 0
      %s69 = sadd.s32 %s68, 1
      %s70 = scalar_select %p67, %s68, %s69
      %p73 = pneg %p67
      %p74 = scmp.eq.s32.totalorder %s12, 3
      %p75 = por %p73, %p74
      %p76 = scmp.ne.s32.totalorder %s68, %s71
      %p77 = scmp.eq.s32.totalorder %s12, 0
      %p78 = por %p76, %p77
      %p79 = scmp.ne.s32.totalorder %s68, %s71
      %p80 = scmp.eq.s32.totalorder %s17, 3
      %p81 = por %p79, %p80
      %p82 = scmp.ne.s32.totalorder %s71, %s72
      %p83 = scmp.eq.s32.totalorder %s17, 0
      %p84 = por %p82, %p83
      %p85 = scmp.ne.s32.totalorder %s71, %s72
      %p86 = scmp.eq.s32.totalorder %s18, 3
      %p87 = por %p85, %p86
      %p89 = scmp.ne.s32.totalorder %s72, %s88
      %p90 = scmp.eq.s32.totalorder %s18, 0
      %p91 = por %p89, %p90
      %p92 = scmp.le.s32.totalorder 1, %s12
      %p93 = scmp.lt.s32.totalorder %s12, 5
      %p94 = pnand %p92, %p93
      %p95 = pneg %p94
      // Predicated region
      $region9: #{custom-call.22} parent=5 // pred_check
        _
      $region10: #{custom-call.22} parent=5 // pred_check_branch
        %97 = sbr.rel (%p94) target = $region12
      $region11: #{custom-call.22} parent=5 // pred_region
        %s98 = ssub.s32 %s12, 1
      $region12: #{custom-call.22} parent=5 // pred_fallthru
        _
      %p99 = scmp.lt.s32.totalorder %s12, 4
      // Predicated region
      $region13: #{custom-call.22} parent=5 // pred_check
        %p100 = pneg %p99
      $region14: #{custom-call.22} parent=5 // pred_check_branch
        %102 = sbr.rel (%p100) target = $region16
      $region15: #{custom-call.22} parent=5 // pred_region
        %s103 = sand.u32 %s12, 1
        %s104 = scalar_lea.sflag [#allocation2], %s103
        %s105 = sand.u32 %s12, 1
        %s106 = smul.addr %s105, 4
        %s107 = scalar_lea.vmem [#allocation1], %s106
        %s109 = ssub.s32 64, 64
        %110 = vsyncadd %s104, %s109
        %s111 = smul.addr %s19, 2
        %s112 = sadd.s32 %s20, %s111
        %s113 = smul.addr %s112, 64
        %s114 = scalar_lea.hbm %s0, %s113
        %s116 = sshll.u32 %s107, 4
        %s117 = int_to_ptr.vmem [resolvable:$true] %s116
        %119 = dma.hbm_to_vmem [thread:$0]  %s114, 64, %s117, %s104
      $region16: #{custom-call.22} parent=5 // pred_fallthru
        _
      %p120 = scmp.le.s32.totalorder 1, %s12
      %p121 = scmp.lt.s32.totalorder %s12, 5
      %p122 = pnand %p120, %p121
      %p123 = pneg %p122
      // Predicated region
      $region17: #{custom-call.22} parent=5 // pred_check
        _
      $region18: #{custom-call.22} parent=5 // pred_check_branch
        %125 = sbr.rel (%p122) target = $region20
      $region19: #{custom-call.22} parent=5 // pred_region
        #allocation10 [shape = 's32[3,128]{1,0}', space=vmem, size = 0x1000, scoped, tag = 'scratch for permutations']
        %s126 = ssub.s32 %s12, 1
        %s127 = sand.u32 %s17, 1
        %s128 = scalar_lea.sflag [#allocation2], %s127
        %s129 = sand.u32 %s17, 1
        %s130 = smul.addr %s129, 4
        %s131 = scalar_lea.vmem [#allocation1], %s130
        %132 = dma.done %s128, 64
        %s133 = sand.u32 %s17, 1
        %s134 = scalar_lea.sflag [#allocation2], %s133
        %s135 = sand.u32 %s17, 1
        %s136 = smul.addr %s135, 4
        %s137 = scalar_lea.vmem [#allocation1], %s136
        %s138 = sand.u32 %s17, 1
        %s139 = sand.u32 %s17, 1
        %s140 = smul.addr %s139, 4
        %s141 = scalar_lea.vmem [#allocation5], %s140
        %p142 = pneg %p54
        %p143 = pneg %p51
        %s144 = sand.u32 %s41, 1
        %s145 = scalar_lea.sflag [#allocation3], %s144
        %s146 = sand.u32 %s41, 1
        %s147 = smul.addr %s146, 2
        %s148 = scalar_lea.vmem [#allocation7], %s147
        %p149 = pneg %p84
        %p150 = pneg %p81
        %s151 = sand.u32 %s71, 1
        %s152 = sand.u32 %s71, 1
        %s153 = smul.addr %s152, 2
        %s154 = scalar_lea.vmem [#allocation9], %s153
        %s156 = sshll.u32 1, 4
        %s157 = ssub.s32 %s156, 1
        %v158 = vld [vmem:[%s137] sm:%s157]
        %159 = vst [vmem:[#allocation0] sm:%s157] %v158
        %s160 = sshrl.u32 %s22, 3
        %s161 = sshrl.u32 %s22, 3
        %v162 = vld [vmem:[#allocation0] sm:$0xff]
        %163 = vst [vmem:[#allocation4] sm:$0xff] %v162
        %s164 = sand.u32 %s22, 7
        %s165 = scalar_lea.vmem [#allocation6], %s164
        %s166 = sand.u32 %s22, 7
        %s167 = scalar_lea.vmem [#allocation8], %s166
        %168 = vst [vmem:[%s165] sm:$0x1] 0
        %v169 = vlaneseq
        %v170 = vshrl.u32 %v169, 7
        %v171 = vmov %v170
        %173 = vst [vmem:[#allocation10] sm:$0xff] %v171
        loop: start=0, step=1, limit=3
        $region22: #{custom-call.22} parent=19 // loop_pre_header
          _
        $region23: #{custom-call.22} parent=19 // loop_header
          %s175 = sphi 0, %s179
          %p176 = scmp.ge.s32.totalorder %s175, 3
        $region24: #{custom-call.22} parent=19 // loop_header_branch
          %178 = sbr.rel (%p176) target = $region28
        $region25: #{custom-call.22} parent=19 // loop_body
          %v180 = vstv %s175
          %v181 = vlaneseq
          %v182 = vshrl.u32 %v181, 7
          %v183 = vmov %v182
          %v184 = vld [vmem:[#allocation4] sm:$0xff]
          %v185 = vand.u32 2147483647, %v184
          %v187 = vstv %s175
          %vm188 = vcmp.ge.s32.totalorder %v183, %v187
          %vm189 = vcmp.lt.s32.totalorder %v183, 3
          %vm190 = vmand %vm188, %vm189
          %vm191 = vcmp.lt.f32.partialorder -inf, %v185
          %vm192 = vmand %vm190, %vm191
          %v193 = vsel %vm192, %v183, %v180
          %v194 = vsel %vm192, %v185, -inf
          %v195 = vrot.slane %v194, 1
          %v196 = vrot.slane %v193, 1
          %vm197 = vcmp.ge.f32.partialorder %v195, %v194
          %v198 = vsel %vm197, %v195, %v194
          %v199 = vsel %vm197, %v196, %v193
          %v200 = vrot.slane %v195, 1
          %v201 = vrot.slane %v196, 1
          %vm202 = vcmp.ge.f32.partialorder %v200, %v198
          %v203 = vsel %vm202, %v200, %v198
          %v204 = vsel %vm202, %v201, %v199
          %v205 = vrot.slane %v200, 1
          %v206 = vrot.slane %v201, 1
          %vm207 = vcmp.ge.f32.partialorder %v205, %v203
          %v208 = vsel %vm207, %v205, %v203
          %v209 = vsel %vm207, %v206, %v204
          %v210 = vrot.slane %v205, 1
          %v211 = vrot.slane %v206, 1
          %vm212 = vcmp.ge.f32.partialorder %v210, %v208
          %v213 = vsel %vm212, %v210, %v208
          %v214 = vsel %vm212, %v211, %v209
          %v215 = vrot.slane %v210, 1
          %v216 = vrot.slane %v211, 1
          %vm217 = vcmp.ge.f32.partialorder %v215, %v213
          %v218 = vsel %vm217, %v215, %v213
          %v219 = vsel %vm217, %v216, %v214
          %v220 = vrot.slane %v215, 1
          %v221 = vrot.slane %v216, 1
          %vm222 = vcmp.ge.f32.partialorder %v220, %v218
          %v223 = vsel %vm222, %v220, %v218
          %v224 = vsel %vm222, %v221, %v219
          %v225 = vrot.slane %v220, 1
          %v226 = vrot.slane %v221, 1
          %vm227 = vcmp.ge.f32.partialorder %v225, %v223
          %v228 = vsel %vm227, %v225, %v223
          %v229 = vsel %vm227, %v226, %v224
          %s230 = ssub.s32 128, %s175
          %231 = vrot.lane.b32.xlu0 %v229, %s230
          %v232 = vpop.permute.xlu0 %231
          %s233 = vtos %v232
          %v234 = vstv %s175
          %v235 = vlaneseq
          %v236 = vand.u32 %v235, 127
          %vm237 = vcmp.eq.s32.totalorder %v236, %v234
          %v238 = vstv %s233
          %v239 = vld [vmem:[%s165] ss:$0 sm:$0xff]
          %v240 = vsel %vm237, %v238, %v239
          %241 = vst [vmem:[%s165] sm:$0x1] %v240
          %s242 = scalar_lea.vmem [#allocation4], %s175
          %s243 = scalar_lea.vmem [#allocation4], %s233
          %v244 = vld [vmem:[%s242] ss:$0 sm:$0xff]
          %v245 = vld [vmem:[%s243] ss:$0 sm:$0xff]
          %246 = vst [vmem:[%s243] sm:$0x1] %v244
          %247 = vst [vmem:[%s242] sm:$0x1] %v245
          %s248 = scalar_lea.vmem [#allocation10], %s175
          %s249 = scalar_lea.vmem [#allocation10], %s233
          %v250 = vld [vmem:[%s248] ss:$0 sm:$0xff]
          %v251 = vld [vmem:[%s249] ss:$0 sm:$0xff]
          %252 = vst [vmem:[%s249] sm:$0x1] %v250
          %253 = vst [vmem:[%s248] sm:$0x1] %v251
          %vm254 = vcmp.ne.f32.partialorder %v245, 0.0
          %vm255 = vmand %vm237, %vm254
          %v256 = vsel %vm255, %v245, 1.0
          %v257 = vlaneseq
          %v258 = vand.u32 %v257, 127
          %v259 = vstv %s175
          %vm260 = vcmp.gt.s32.totalorder %v258, %v259
          %v261 = vsel %vm260, %v245, 0.0
          %v262 = vlaneseq
          %v263 = vshrl.u32 %v262, 7
          %v264 = vmov %v263
          %v265 = vld [vmem:[#allocation4] sm:$0xff]
          %v267 = vstv %s175
          %vm268 = vcmp.gt.s32.totalorder %v264, %v267
          %v269 = vsel %vm268, %v256, 1.0
          %v270 = vrcp.pop %v269
          %v271 = vmul.f32 %v265, %v270
          %vm272 = vmand %vm268, %vm237
          %v273 = vsel %vm272, %v271, 0.0
          %274 = vadd.xlane.f32.xlu0 %v273
          %v275 = vpop.xlane.xlu0 %274
          %v276 = vmul.f32 %v275, %v261
          %v277 = vsub.f32 %v271, %v276
          %278 = vst [vmem:[#allocation4] sm:$0xff] %v277
        $region26: #{custom-call.22} parent=19 // loop_footer
          %s179 = sadd.s32 1, %s175
        $region27: #{custom-call.22} parent=19 // loop_footer_branch
          %174 = sbr.rel target = $region23
        $region28: #{custom-call.22} parent=19 // loop_exit
          _
        %v279 = vld [vmem:[#allocation10] sm:$0xff]
        %s280 = scalar_lea.vmem [#allocation10], 8
        %s281 = scalar_lea.vmem [#allocation10], 16
        %s282 = scalar_lea.vmem [#allocation10], 24
        %s283 = scalar_lea.vmem [#allocation10], 32
        %s284 = scalar_lea.vmem [#allocation10], 40
        %s285 = scalar_lea.vmem [#allocation10], 48
        %s286 = scalar_lea.vmem [#allocation10], 56
        %s287 = scalar_lea.vmem [#allocation10], 64
        %s288 = scalar_lea.vmem [#allocation10], 72
        %s289 = scalar_lea.vmem [#allocation10], 80
        %s290 = scalar_lea.vmem [#allocation10], 88
        %s291 = scalar_lea.vmem [#allocation10], 96
        %s292 = scalar_lea.vmem [#allocation10], 104
        %s293 = scalar_lea.vmem [#allocation10], 112
        %s294 = scalar_lea.vmem [#allocation10], 120
        %295 = vxpose.xlu0.b32.start [1/16] %v279, 128
        %296 = vxpose.xlu0.b32.cont [2/16] 0, 128
        %297 = vxpose.xlu0.b32.cont [3/16] 0, 128
        %298 = vxpose.xlu0.b32.cont [4/16] 0, 128
        %299 = vxpose.xlu0.b32.cont [5/16] 0, 128
        %300 = vxpose.xlu0.b32.cont [6/16] 0, 128
        %301 = vxpose.xlu0.b32.cont [7/16] 0, 128
        %302 = vxpose.xlu0.b32.cont [8/16] 0, 128
        %303 = vxpose.xlu0.b32.cont [9/16] 0, 128
        %304 = vxpose.xlu0.b32.cont [10/16] 0, 128
        %305 = vxpose.xlu0.b32.cont [11/16] 0, 128
        %306 = vxpose.xlu0.b32.cont [12/16] 0, 128
        %307 = vxpose.xlu0.b32.cont [13/16] 0, 128
        %308 = vxpose.xlu0.b32.cont [14/16] 0, 128
        %309 = vxpose.xlu0.b32.cont [15/16] 0, 128
        %310 = vxpose.xlu0.b32.end [16/16] 0, 128
        %v311 = vpop.trf.xlu0
        %v312 = vpop.trf.xlu0
        %v313 = vpop.trf.xlu0
        %v314 = vpop.trf.xlu0
        %v315 = vpop.trf.xlu0
        %v316 = vpop.trf.xlu0
        %v317 = vpop.trf.xlu0
        %v318 = vpop.trf.xlu0
        %v319 = vpop.trf.xlu0
        %v320 = vpop.trf.xlu0
        %v321 = vpop.trf.xlu0
        %v322 = vpop.trf.xlu0
        %v323 = vpop.trf.xlu0
        %v324 = vpop.trf.xlu0
        %v325 = vpop.trf.xlu0
        %v326 = vpop.trf.xlu0
        %327 = vst [vmem:[%s167] sm:$0x1] %v311
        %s329 = sshll.u32 1, 4
        %s330 = ssub.s32 %s329, 1
        %v332 = vld [vmem:[#allocation4] sm:%s330]
        %s333 = sshll.u32 1, 4
        %s334 = ssub.s32 %s333, 1
        %335 = vst [vmem:[%s141] sm:%s334] %v332
        %s337 = sshll.u32 1, 2
        %s338 = ssub.s32 %s337, 1
        %v340 = vld [vmem:[#allocation6] sm:%s338]
        %s341 = sshll.u32 1, 2
        %s342 = ssub.s32 %s341, 1
        %343 = vst [vmem:[%s148] sm:%s342] %v340
        %s345 = sshll.u32 1, 2
        %s346 = ssub.s32 %s345, 1
        %v348 = vld [vmem:[#allocation8] sm:%s346]
        %s349 = sshll.u32 1, 2
        %s350 = ssub.s32 %s349, 1
        %351 = vst [vmem:[%s154] sm:%s350] %v348
        %s352 = sand.u32 %s17, 1
        %s353 = sand.u32 %s17, 1
        %s354 = smul.addr %s353, 4
        %s355 = scalar_lea.vmem [#allocation5], %s354
        %s356 = sand.u32 %s41, 1
        %s357 = scalar_lea.sflag [#allocation3], %s356
        %s358 = sand.u32 %s41, 1
        %s359 = smul.addr %s358, 2
        %s360 = scalar_lea.vmem [#allocation7], %s359
        %s361 = sand.u32 %s71, 1
        %s362 = sand.u32 %s71, 1
        %s363 = smul.addr %s362, 2
        %s364 = scalar_lea.vmem [#allocation9], %s363
        %s365 = smul.addr %s21, 2
        %s366 = sadd.s32 %s22, %s365
        %s367 = smul.addr %s366, 4
        %s368 = scalar_lea.vmem %s1, %s367
        // Predicated region
        $region29: #{custom-call.22} parent=19 // pred_check
          _
        $region30: #{custom-call.22} parent=19 // pred_check_branch
          %370 = sbr.rel (0) target = $region32
        $region31: #{custom-call.22} parent=19 // pred_region
          // Predicated region
          $region33: #{custom-call.22} parent=31 // pred_check
            _
          $region34: #{custom-call.22} parent=31 // pred_check_branch
            %372 = sbr.rel target = $region36
          $region35: #{custom-call.22} parent=31 // pred_region
            // Predicated region
            $region48: #{custom-call.22} parent=35 // pred_check
              _
            $region49: #{custom-call.22} parent=35 // pred_check_branch
              %388 = sbr.rel (0) target = $region51
            $region50: #{custom-call.22} parent=35 // pred_region
              %s390 = ssub.s32 16, 1
              loop: start=0, step=1, limit=1
              $region52: #{custom-call.22} parent=50 // loop_pre_header
                _
              $region53: #{custom-call.22} parent=50 // loop_header
                %s392 = sphi 0, %s396
                %p393 = scmp.ge.s32.totalorder %s392, 1
                %s397 = sphi %s355, %s355
                %s398 = sphi %s368, %s368
              $region54: #{custom-call.22} parent=50 // loop_header_branch
                %395 = sbr.rel (%p393) target = $region58
              $region55: #{custom-call.22} parent=50 // loop_body
                %v399 = vld [vmem:[%s397] sm:%s390]
                %400 = vst [vmem:[%s398] sm:%s390] %v399
              $region56: #{custom-call.22} parent=50 // loop_footer
                %s396 = sadd.s32 1, %s392
              $region57: #{custom-call.22} parent=50 // loop_footer_branch
                %391 = sbr.rel target = $region53
              $region58: #{custom-call.22} parent=50 // loop_exit
                _
            $region51: #{custom-call.22} parent=35 // pred_fallthru
              _
          $region36: #{custom-call.22} parent=31 // pred_fallthru
            _
          // Predicated region
          $region37: #{custom-call.22} parent=31 // pred_check
            _
          $region38: #{custom-call.22} parent=31 // pred_check_branch
            %374 = sbr.rel (0) target = $region40
          $region39: #{custom-call.22} parent=31 // pred_region
            %s376 = ssub.s32 16, 1
            loop: start=0, step=1, limit=1
            $region41: #{custom-call.22} parent=39 // loop_pre_header
              _
            $region42: #{custom-call.22} parent=39 // loop_header
              %s378 = sphi 0, %s382
              %p379 = scmp.ge.s32.totalorder %s378, 1
              %s383 = sphi %s355, %s355
              %s384 = sphi %s368, %s368
            $region43: #{custom-call.22} parent=39 // loop_header_branch
              %381 = sbr.rel (%p379) target = $region47
            $region44: #{custom-call.22} parent=39 // loop_body
              %v385 = vld [vmem:[%s383] sm:%s376]
              %386 = vst [vmem:[%s384] sm:%s376] %v385
            $region45: #{custom-call.22} parent=39 // loop_footer
              %s382 = sadd.s32 1, %s378
            $region46: #{custom-call.22} parent=39 // loop_footer_branch
              %377 = sbr.rel target = $region42
            $region47: #{custom-call.22} parent=39 // loop_exit
              _
          $region40: #{custom-call.22} parent=31 // pred_fallthru
            _
        $region32: #{custom-call.22} parent=19 // pred_fallthru
          _
        %401 = vnop
        // Predicated region
        $region59: #{custom-call.22} parent=19 // pred_check
          %p402 = pneg %p51
        $region60: #{custom-call.22} parent=19 // pred_check_branch
          %404 = sbr.rel (%p402) target = $region62
        $region61: #{custom-call.22} parent=19 // pred_region
          %s405 = sshrl.u32 %s22, 3
          %s407 = ssub.s32 32, 32
          %408 = vsyncadd %s357, %s407
          %s409 = sadd.s32 %s405, %s21
          %s410 = smul.addr %s409, 32
          %s411 = scalar_lea.hbm %s2, %s410
          %s413 = sshll.u32 %s360, 4
          %s414 = int_to_ptr.vmem [resolvable:$true] %s413
          %416 = dma.vmem_to_hbm [thread:$0]  %s414, 32, %s411, %s357
        $region62: #{custom-call.22} parent=19 // pred_fallthru
          _
        // Predicated region
        $region63: #{custom-call.22} parent=19 // pred_check
          %p417 = pneg %p81
        $region64: #{custom-call.22} parent=19 // pred_check_branch
          %419 = sbr.rel (%p417) target = $region66
        $region65: #{custom-call.22} parent=19 // pred_region
          %s420 = sshrl.u32 %s22, 3
          %s421 = sadd.s32 %s420, %s21
          %s422 = smul.addr %s421, 2
          %s423 = scalar_lea.vmem %s3, %s422
          // Predicated region
          $region67: #{custom-call.22} parent=65 // pred_check
            _
          $region68: #{custom-call.22} parent=65 // pred_check_branch
            %425 = sbr.rel (0) target = $region70
          $region69: #{custom-call.22} parent=65 // pred_region
            // Predicated region
            $region71: #{custom-call.22} parent=69 // pred_check
              _
            $region72: #{custom-call.22} parent=69 // pred_check_branch
              %427 = sbr.rel target = $region74
            $region73: #{custom-call.22} parent=69 // pred_region
              // Predicated region
              $region86: #{custom-call.22} parent=73 // pred_check
                _
              $region87: #{custom-call.22} parent=73 // pred_check_branch
                %443 = sbr.rel (0) target = $region89
              $region88: #{custom-call.22} parent=73 // pred_region
                %s445 = ssub.s32 4, 1
                loop: start=0, step=1, limit=1
                $region90: #{custom-call.22} parent=88 // loop_pre_header
                  _
                $region91: #{custom-call.22} parent=88 // loop_header
                  %s447 = sphi 0, %s451
                  %p448 = scmp.ge.s32.totalorder %s447, 1
                  %s452 = sphi %s364, %s364
                  %s453 = sphi %s423, %s423
                $region92: #{custom-call.22} parent=88 // loop_header_branch
                  %450 = sbr.rel (%p448) target = $region96
                $region93: #{custom-call.22} parent=88 // loop_body
                  %v454 = vld [vmem:[%s452] sm:%s445]
                  %455 = vst [vmem:[%s453] sm:%s445] %v454
                $region94: #{custom-call.22} parent=88 // loop_footer
                  %s451 = sadd.s32 1, %s447
                $region95: #{custom-call.22} parent=88 // loop_footer_branch
                  %446 = sbr.rel target = $region91
                $region96: #{custom-call.22} parent=88 // loop_exit
                  _
              $region89: #{custom-call.22} parent=73 // pred_fallthru
                _
            $region74: #{custom-call.22} parent=69 // pred_fallthru
              _
            // Predicated region
            $region75: #{custom-call.22} parent=69 // pred_check
              _
            $region76: #{custom-call.22} parent=69 // pred_check_branch
              %429 = sbr.rel (0) target = $region78
            $region77: #{custom-call.22} parent=69 // pred_region
              %s431 = ssub.s32 4, 1
              loop: start=0, step=1, limit=1
              $region79: #{custom-call.22} parent=77 // loop_pre_header
                _
              $region80: #{custom-call.22} parent=77 // loop_header
                %s433 = sphi 0, %s437
                %p434 = scmp.ge.s32.totalorder %s433, 1
                %s438 = sphi %s364, %s364
                %s439 = sphi %s423, %s423
              $region81: #{custom-call.22} parent=77 // loop_header_branch
                %436 = sbr.rel (%p434) target = $region85
              $region82: #{custom-call.22} parent=77 // loop_body
                %v440 = vld [vmem:[%s438] sm:%s431]
                %441 = vst [vmem:[%s439] sm:%s431] %v440
              $region83: #{custom-call.22} parent=77 // loop_footer
                %s437 = sadd.s32 1, %s433
              $region84: #{custom-call.22} parent=77 // loop_footer_branch
                %432 = sbr.rel target = $region80
              $region85: #{custom-call.22} parent=77 // loop_exit
                _
            $region78: #{custom-call.22} parent=69 // pred_fallthru
              _
          $region70: #{custom-call.22} parent=65 // pred_fallthru
            _
          %456 = vnop
        $region66: #{custom-call.22} parent=19 // pred_fallthru
          _
      $region20: #{custom-call.22} parent=5 // pred_fallthru
        _
      %p457 = scmp.le.s32.totalorder 2, %s12
      // Predicated region
      $region97: #{custom-call.22} parent=5 // pred_check
        %p458 = pneg %p457
      $region98: #{custom-call.22} parent=5 // pred_check_branch
        %460 = sbr.rel (%p458) target = $region100
      $region99: #{custom-call.22} parent=5 // pred_region
        %s461 = ssub.s32 %s12, 2
        %s462 = sand.u32 %s18, 1
        %s463 = sand.u32 %s18, 1
        %s464 = smul.addr %s463, 4
        %s465 = scalar_lea.vmem [#allocation5], %s464
        // Predicated region
        $region101: #{custom-call.22} parent=99 // pred_check
          %p466 = pneg %p57
        $region102: #{custom-call.22} parent=99 // pred_check_branch
          %468 = sbr.rel (%p466) target = $region104
        $region103: #{custom-call.22} parent=99 // pred_region
          %s469 = sand.u32 %s42, 1
          %s470 = scalar_lea.sflag [#allocation3], %s469
          %s471 = sand.u32 %s42, 1
          %s472 = smul.addr %s471, 2
          %s473 = scalar_lea.vmem [#allocation7], %s472
          %474 = dma.done %s470, 32
        $region104: #{custom-call.22} parent=99 // pred_fallthru
          _
        // Predicated region
        $region105: #{custom-call.22} parent=99 // pred_check
          %p475 = pneg %p87
        $region106: #{custom-call.22} parent=99 // pred_check_branch
          %477 = sbr.rel (%p475) target = $region108
        $region107: #{custom-call.22} parent=99 // pred_region
          %s478 = sand.u32 %s72, 1
          %s479 = sand.u32 %s72, 1
          %s480 = smul.addr %s479, 2
          %s481 = scalar_lea.vmem [#allocation9], %s480
        $region108: #{custom-call.22} parent=99 // pred_fallthru
          _
      $region100: #{custom-call.22} parent=5 // pred_fallthru
        _
    $region6: #{custom-call.22} parent=1 // loop_footer
      %s16 = sadd.s32 1, %s12
    $region7: #{custom-call.22} parent=1 // loop_footer_branch
      %11 = sbr.rel target = $region3
    $region8: #{custom-call.22} parent=1 // loop_exit
      _
    %482 = vsyncpa [#allocation2], 1
    %s483 = scalar_lea.sflag [#allocation2], 1
    %484 = vsyncpa %s483, 1
    %485 = vsyncpa [#allocation3], 1
    %s486 = scalar_lea.sflag [#allocation3], 1
    %487 = vsyncpa %s486, 1

// kernel: custom-call.24
$region0: #{custom-call.24}
  %s0 = inlined_call_operand.vmem [shape: f32[2,2,1,3,3], index: 0, kind: input, shape index: {}]
  %s1 = inlined_call_operand.vmem [shape: f32[2,2,1,3,3], index: 1, kind: output, shape index: {}]
  $region1: #{custom-call.24} parent=0
    #allocation0 [shape = 'u8[4096]{0}', space=vmem, size = 0x1000, scoped, tag = 'operand span for operand 0']
    #allocation1 [shape = 'u8[4096]{0}', space=vmem, size = 0x1000, scoped, tag = 'packed  for operand 0']
    #allocation2 [shape = 'u8[4096]{0}', space=vmem, size = 0x1000, scoped, tag = 'operand span for operand 1']
    #allocation3 [shape = 'u8[4096]{0}', space=vmem, size = 0x1000, scoped, tag = 'packed  for operand 1']
    loop: start=0, step=1, limit=6
    $region2: #{custom-call.24} parent=1 // loop_pre_header
      _
    $region3: #{custom-call.24} parent=1 // loop_header
      %s3 = sphi 0, %s7
      %p4 = scmp.ge.s32.totalorder %s3, 6
      %s10 = sphi 0, %s43
      %s11 = sphi 0, %s39
      %s12 = sphi 0, %s35
      %s13 = sphi 0, %s31
      %s14 = sphi 0, %s27
      %s15 = sphi 0, %s10
      %s16 = sphi 0, %s11
      %s17 = sphi 0, %s12
      %s18 = sphi 0, %s13
      %s19 = sphi 0, %s14
      %s20 = sphi 0, %s15
      %s21 = sphi 0, %s16
      %s22 = sphi 0, %s17
      %s23 = sphi 0, %s18
      %s24 = sphi 0, %s19
    $region4: #{custom-call.24} parent=1 // loop_header_branch
      %6 = sbr.rel (%p4) target = $region8
    $region5: #{custom-call.24} parent=1 // loop_body
      %s8 = ssub.s32 %s3, 1
      %s9 = ssub.s32 %s3, 2
      %s25 = sadd.s32 1, %s14
      %p26 = scmp.ge.s32.totalorder %s25, 1
      %s27 = scalar_select %p26, 0, %s25
      %s28 = sadd.s32 1, %s13
      %s29 = scalar_select %p26, %s28, %s13
      %p30 = scmp.ge.s32.totalorder %s29, 1
      %s31 = scalar_select %p30, 0, %s29
      %s32 = sadd.s32 1, %s12
      %s33 = scalar_select %p30, %s32, %s12
      %p34 = scmp.ge.s32.totalorder %s33, 1
      %s35 = scalar_select %p34, 0, %s33
      %s36 = sadd.s32 1, %s11
      %s37 = scalar_select %p34, %s36, %s11
      %p38 = scmp.ge.s32.totalorder %s37, 2
      %s39 = scalar_select %p38, 0, %s37
      %s40 = sadd.s32 1, %s10
      %s41 = scalar_select %p38, %s40, %s10
      %p42 = scmp.ge.s32.totalorder %s41, 2
      %s43 = scalar_select %p42, 0, %s41
      %p44 = scmp.le.s32.totalorder 1, %s3
      %p45 = scmp.lt.s32.totalorder %s3, 5
      %p46 = pnand %p44, %p45
      %p47 = pneg %p46
      // Predicated region
      $region9: #{custom-call.24} parent=5 // pred_check
        _
      $region10: #{custom-call.24} parent=5 // pred_check_branch
        %49 = sbr.rel (%p46) target = $region12
      $region11: #{custom-call.24} parent=5 // pred_region
        %s50 = ssub.s32 %s3, 1
      $region12: #{custom-call.24} parent=5 // pred_fallthru
        _
      %p51 = scmp.lt.s32.totalorder %s3, 4
      // Predicated region
      $region13: #{custom-call.24} parent=5 // pred_check
        %p52 = pneg %p51
      $region14: #{custom-call.24} parent=5 // pred_check_branch
        %54 = sbr.rel (%p52) target = $region16
      $region15: #{custom-call.24} parent=5 // pred_region
        %s55 = sand.u32 %s3, 1
        %s56 = sand.u32 %s3, 1
        %s57 = smul.addr %s56, 4
        %s58 = scalar_lea.vmem [#allocation1], %s57
        %s59 = sadd.s32 %s14, %s13
        %s60 = sadd.s32 %s59, %s12
        %s61 = sadd.s32 %s60, %s11
        %s62 = smul.addr %s10, 2
        %s63 = sadd.s32 %s61, %s62
        %s64 = smul.addr %s63, 4
        %s65 = scalar_lea.vmem %s0, %s64
        // Predicated region
        $region17: #{custom-call.24} parent=15 // pred_check
          _
        $region18: #{custom-call.24} parent=15 // pred_check_branch
          %67 = sbr.rel (0) target = $region20
        $region19: #{custom-call.24} parent=15 // pred_region
          // Predicated region
          $region21: #{custom-call.24} parent=19 // pred_check
            _
          $region22: #{custom-call.24} parent=19 // pred_check_branch
            %69 = sbr.rel target = $region24
          $region23: #{custom-call.24} parent=19 // pred_region
            // Predicated region
            $region36: #{custom-call.24} parent=23 // pred_check
              _
            $region37: #{custom-call.24} parent=23 // pred_check_branch
              %85 = sbr.rel (0) target = $region39
            $region38: #{custom-call.24} parent=23 // pred_region
              %s87 = ssub.s32 16, 1
              loop: start=0, step=1, limit=1
              $region40: #{custom-call.24} parent=38 // loop_pre_header
                _
              $region41: #{custom-call.24} parent=38 // loop_header
                %s89 = sphi 0, %s93
                %p90 = scmp.ge.s32.totalorder %s89, 1
                %s94 = sphi %s65, %s65
                %s95 = sphi %s58, %s58
              $region42: #{custom-call.24} parent=38 // loop_header_branch
                %92 = sbr.rel (%p90) target = $region46
              $region43: #{custom-call.24} parent=38 // loop_body
                %v96 = vld [vmem:[%s94] sm:%s87]
                %97 = vst [vmem:[%s95] sm:%s87] %v96
              $region44: #{custom-call.24} parent=38 // loop_footer
                %s93 = sadd.s32 1, %s89
              $region45: #{custom-call.24} parent=38 // loop_footer_branch
                %88 = sbr.rel target = $region41
              $region46: #{custom-call.24} parent=38 // loop_exit
                _
            $region39: #{custom-call.24} parent=23 // pred_fallthru
              _
          $region24: #{custom-call.24} parent=19 // pred_fallthru
            _
          // Predicated region
          $region25: #{custom-call.24} parent=19 // pred_check
            _
          $region26: #{custom-call.24} parent=19 // pred_check_branch
            %71 = sbr.rel (0) target = $region28
          $region27: #{custom-call.24} parent=19 // pred_region
            %s73 = ssub.s32 16, 1
            loop: start=0, step=1, limit=1
            $region29: #{custom-call.24} parent=27 // loop_pre_header
              _
            $region30: #{custom-call.24} parent=27 // loop_header
              %s75 = sphi 0, %s79
              %p76 = scmp.ge.s32.totalorder %s75, 1
              %s80 = sphi %s65, %s65
              %s81 = sphi %s58, %s58
            $region31: #{custom-call.24} parent=27 // loop_header_branch
              %78 = sbr.rel (%p76) target = $region35
            $region32: #{custom-call.24} parent=27 // loop_body
              %v82 = vld [vmem:[%s80] sm:%s73]
              %83 = vst [vmem:[%s81] sm:%s73] %v82
            $region33: #{custom-call.24} parent=27 // loop_footer
              %s79 = sadd.s32 1, %s75
            $region34: #{custom-call.24} parent=27 // loop_footer_branch
              %74 = sbr.rel target = $region30
            $region35: #{custom-call.24} parent=27 // loop_exit
              _
          $region28: #{custom-call.24} parent=19 // pred_fallthru
            _
        $region20: #{custom-call.24} parent=15 // pred_fallthru
          _
        %98 = vnop
      $region16: #{custom-call.24} parent=5 // pred_fallthru
        _
      %p99 = scmp.le.s32.totalorder 1, %s3
      %p100 = scmp.lt.s32.totalorder %s3, 5
      %p101 = pnand %p99, %p100
      %p102 = pneg %p101
      // Predicated region
      $region47: #{custom-call.24} parent=5 // pred_check
        _
      $region48: #{custom-call.24} parent=5 // pred_check_branch
        %104 = sbr.rel (%p101) target = $region50
      $region49: #{custom-call.24} parent=5 // pred_region
        #allocation4 [shape = 'f32[3,3]{1,0}', space=vmem, size = 0x1000, scoped, tag = 'rescaled input a']
        %s105 = ssub.s32 %s3, 1
        %s106 = sand.u32 %s8, 1
        %s107 = sand.u32 %s8, 1
        %s108 = smul.addr %s107, 4
        %s109 = scalar_lea.vmem [#allocation1], %s108
        %s110 = sand.u32 %s8, 1
        %s111 = sand.u32 %s8, 1
        %s112 = smul.addr %s111, 4
        %s113 = scalar_lea.vmem [#allocation1], %s112
        %s114 = sand.u32 %s8, 1
        %s115 = sand.u32 %s8, 1
        %s116 = smul.addr %s115, 4
        %s117 = scalar_lea.vmem [#allocation3], %s116
        %s119 = sshll.u32 1, 4
        %s120 = ssub.s32 %s119, 1
        %v121 = vld [vmem:[%s113] sm:%s120]
        %122 = vst [vmem:[#allocation0] sm:%s120] %v121
        %v123 = vlaneseq
        %v124 = vand.u32 %v123, 127
        %vm125 = vcmp.lt.s32.totalorder %v124, 3
        %v126 = vlaneseq
        %v127 = vshrl.u32 %v126, 7
        %vm129 = vcmp.eq.s32.totalorder %v127, %v124
        %v130 = vld [vmem:[#allocation0] sm:$0xff]
        %v131 = vsel %vm129, %v130, 0.0
        %132 = vadd.xlane.f32.xlu0 %v131
        %v133 = vpop.xlane.xlu0 %132
        %vm134 = vcmp.ge.s32.totalorder %v127, %v124
        %vm135 = vmand %vm134, %vm125
        %v136 = vsel %vm135, %v130, 0.0
        %v137 = vrcp.pop %v133
        %v138 = vmul.f32 %v136, %v137
        %139 = vst [vmem:[#allocation4] sm:$0xff] %v138
        %v140 = vlaneseq
        %v141 = vand.u32 %v140, 127
        %v142 = vlaneseq
        %v143 = vshrl.u32 %v142, 7
        %vm145 = vcmp.eq.s32.totalorder %v141, %v143
        %v146 = vlaneseq
        %v147 = vand.u32 %v146, 127
        %vm148 = vcmp.eq.s32.totalorder %v147, 0
        %v149 = vsel %vm148, 1.0, -1.0
        %v150 = vsel %vm145, %v149, 0.0
        %s151 = scalar_lea.vmem [#allocation4], 1
        %v152 = vld [vmem:[%s151] ss:$0 sm:$0xff]
        %v153 = vxor.u32 %v152, 2147483648
        %v154 = vlaneseq
        %v155 = vand.u32 %v154, 127
        %vm156 = vcmp.eq.s32.totalorder %v155, 1
        %v157 = vmul.f32 %v153, %v150
        %158 = vadd.xlane.f32.xlu0 %v157
        %v159 = vpop.xlane.xlu0 %158
        %v160 = vsel %vm156, %v159, %v150
        %s161 = scalar_lea.vmem [#allocation4], 2
        %v162 = vld [vmem:[%s161] ss:$0 sm:$0xff]
        %v163 = vxor.u32 %v162, 2147483648
        %v164 = vlaneseq
        %v165 = vand.u32 %v164, 127
        %vm166 = vcmp.eq.s32.totalorder %v165, 2
        %v167 = vmul.f32 %v163, %v160
        %168 = vadd.xlane.f32.xlu0 %v167
        %v169 = vpop.xlane.xlu0 %168
        %v170 = vsel %vm166, %v169, %v160
        %v171 = vrcp.pop %v133
        %v172 = vmul.f32 %v170, %v171
        %vm173 = vweird.f32 %v133
        %v174 = vsel %vm173, %v170, %v172
        %175 = vst [vmem:[#allocation2] sm:$0xff] %v174
        %s177 = sshll.u32 1, 4
        %s178 = ssub.s32 %s177, 1
        %v180 = vld [vmem:[#allocation2] sm:%s178]
        %s181 = sshll.u32 1, 4
        %s182 = ssub.s32 %s181, 1
        %183 = vst [vmem:[%s117] sm:%s182] %v180
        %s184 = sand.u32 %s8, 1
        %s185 = sand.u32 %s8, 1
        %s186 = smul.addr %s185, 4
        %s187 = scalar_lea.vmem [#allocation3], %s186
        %s188 = sadd.s32 %s19, %s18
        %s189 = sadd.s32 %s188, %s17
        %s190 = sadd.s32 %s189, %s16
        %s191 = smul.addr %s15, 2
        %s192 = sadd.s32 %s190, %s191
        %s193 = smul.addr %s192, 4
        %s194 = scalar_lea.vmem %s1, %s193
        // Predicated region
        $region51: #{custom-call.24} parent=49 // pred_check
          _
        $region52: #{custom-call.24} parent=49 // pred_check_branch
          %196 = sbr.rel (0) target = $region54
        $region53: #{custom-call.24} parent=49 // pred_region
          // Predicated region
          $region55: #{custom-call.24} parent=53 // pred_check
            _
          $region56: #{custom-call.24} parent=53 // pred_check_branch
            %198 = sbr.rel target = $region58
          $region57: #{custom-call.24} parent=53 // pred_region
            // Predicated region
            $region70: #{custom-call.24} parent=57 // pred_check
              _
            $region71: #{custom-call.24} parent=57 // pred_check_branch
              %214 = sbr.rel (0) target = $region73
            $region72: #{custom-call.24} parent=57 // pred_region
              %s216 = ssub.s32 16, 1
              loop: start=0, step=1, limit=1
              $region74: #{custom-call.24} parent=72 // loop_pre_header
                _
              $region75: #{custom-call.24} parent=72 // loop_header
                %s218 = sphi 0, %s222
                %p219 = scmp.ge.s32.totalorder %s218, 1
                %s223 = sphi %s187, %s187
                %s224 = sphi %s194, %s194
              $region76: #{custom-call.24} parent=72 // loop_header_branch
                %221 = sbr.rel (%p219) target = $region80
              $region77: #{custom-call.24} parent=72 // loop_body
                %v225 = vld [vmem:[%s223] sm:%s216]
                %226 = vst [vmem:[%s224] sm:%s216] %v225
              $region78: #{custom-call.24} parent=72 // loop_footer
                %s222 = sadd.s32 1, %s218
              $region79: #{custom-call.24} parent=72 // loop_footer_branch
                %217 = sbr.rel target = $region75
              $region80: #{custom-call.24} parent=72 // loop_exit
                _
            $region73: #{custom-call.24} parent=57 // pred_fallthru
              _
          $region58: #{custom-call.24} parent=53 // pred_fallthru
            _
          // Predicated region
          $region59: #{custom-call.24} parent=53 // pred_check
            _
          $region60: #{custom-call.24} parent=53 // pred_check_branch
            %200 = sbr.rel (0) target = $region62
          $region61: #{custom-call.24} parent=53 // pred_region
            %s202 = ssub.s32 16, 1
            loop: start=0, step=1, limit=1
            $region63: #{custom-call.24} parent=61 // loop_pre_header
              _
            $region64: #{custom-call.24} parent=61 // loop_header
              %s204 = sphi 0, %s208
              %p205 = scmp.ge.s32.totalorder %s204, 1
              %s209 = sphi %s187, %s187
              %s210 = sphi %s194, %s194
            $region65: #{custom-call.24} parent=61 // loop_header_branch
              %207 = sbr.rel (%p205) target = $region69
            $region66: #{custom-call.24} parent=61 // loop_body
              %v211 = vld [vmem:[%s209] sm:%s202]
              %212 = vst [vmem:[%s210] sm:%s202] %v211
            $region67: #{custom-call.24} parent=61 // loop_footer
              %s208 = sadd.s32 1, %s204
            $region68: #{custom-call.24} parent=61 // loop_footer_branch
              %203 = sbr.rel target = $region64
            $region69: #{custom-call.24} parent=61 // loop_exit
              _
          $region62: #{custom-call.24} parent=53 // pred_fallthru
            _
        $region54: #{custom-call.24} parent=49 // pred_fallthru
          _
        %227 = vnop
      $region50: #{custom-call.24} parent=5 // pred_fallthru
        _
      %p228 = scmp.le.s32.totalorder 2, %s3
      // Predicated region
      $region81: #{custom-call.24} parent=5 // pred_check
        %p229 = pneg %p228
      $region82: #{custom-call.24} parent=5 // pred_check_branch
        %231 = sbr.rel (%p229) target = $region84
      $region83: #{custom-call.24} parent=5 // pred_region
        %s232 = ssub.s32 %s3, 2
        %s233 = sand.u32 %s9, 1
        %s234 = sand.u32 %s9, 1
        %s235 = smul.addr %s234, 4
        %s236 = scalar_lea.vmem [#allocation3], %s235
      $region84: #{custom-call.24} parent=5 // pred_fallthru
        _
    $region6: #{custom-call.24} parent=1 // loop_footer
      %s7 = sadd.s32 1, %s3
    $region7: #{custom-call.24} parent=1 // loop_footer_branch
      %2 = sbr.rel target = $region3
    $region8: #{custom-call.24} parent=1 // loop_exit
      _

// kernel: custom-call.23
$region0: #{custom-call.23}
  %s0 = inlined_call_operand.vmem [shape: f32[2,2,1,3,3], index: 0, kind: input, shape index: {}]
  %s1 = inlined_call_operand.vmem [shape: f32[2,2,1,3,3], index: 1, kind: output, shape index: {}]
  $region1: #{custom-call.23} parent=0
    #allocation0 [shape = 'u8[4096]{0}', space=vmem, size = 0x1000, scoped, tag = 'operand span for operand 0']
    #allocation1 [shape = 'u8[4096]{0}', space=vmem, size = 0x1000, scoped, tag = 'packed  for operand 0']
    #allocation2 [shape = 'u8[4096]{0}', space=vmem, size = 0x1000, scoped, tag = 'operand span for operand 1']
    #allocation3 [shape = 'u8[4096]{0}', space=vmem, size = 0x1000, scoped, tag = 'packed  for operand 1']
    loop: start=0, step=1, limit=6
    $region2: #{custom-call.23} parent=1 // loop_pre_header
      _
    $region3: #{custom-call.23} parent=1 // loop_header
      %s3 = sphi 0, %s7
      %p4 = scmp.ge.s32.totalorder %s3, 6
      %s10 = sphi 0, %s43
      %s11 = sphi 0, %s39
      %s12 = sphi 0, %s35
      %s13 = sphi 0, %s31
      %s14 = sphi 0, %s27
      %s15 = sphi 0, %s10
      %s16 = sphi 0, %s11
      %s17 = sphi 0, %s12
      %s18 = sphi 0, %s13
      %s19 = sphi 0, %s14
      %s20 = sphi 0, %s15
      %s21 = sphi 0, %s16
      %s22 = sphi 0, %s17
      %s23 = sphi 0, %s18
      %s24 = sphi 0, %s19
    $region4: #{custom-call.23} parent=1 // loop_header_branch
      %6 = sbr.rel (%p4) target = $region8
    $region5: #{custom-call.23} parent=1 // loop_body
      %s8 = ssub.s32 %s3, 1
      %s9 = ssub.s32 %s3, 2
      %s25 = sadd.s32 1, %s14
      %p26 = scmp.ge.s32.totalorder %s25, 1
      %s27 = scalar_select %p26, 0, %s25
      %s28 = sadd.s32 1, %s13
      %s29 = scalar_select %p26, %s28, %s13
      %p30 = scmp.ge.s32.totalorder %s29, 1
      %s31 = scalar_select %p30, 0, %s29
      %s32 = sadd.s32 1, %s12
      %s33 = scalar_select %p30, %s32, %s12
      %p34 = scmp.ge.s32.totalorder %s33, 1
      %s35 = scalar_select %p34, 0, %s33
      %s36 = sadd.s32 1, %s11
      %s37 = scalar_select %p34, %s36, %s11
      %p38 = scmp.ge.s32.totalorder %s37, 2
      %s39 = scalar_select %p38, 0, %s37
      %s40 = sadd.s32 1, %s10
      %s41 = scalar_select %p38, %s40, %s10
      %p42 = scmp.ge.s32.totalorder %s41, 2
      %s43 = scalar_select %p42, 0, %s41
      %p44 = scmp.le.s32.totalorder 1, %s3
      %p45 = scmp.lt.s32.totalorder %s3, 5
      %p46 = pnand %p44, %p45
      %p47 = pneg %p46
      // Predicated region
      $region9: #{custom-call.23} parent=5 // pred_check
        _
      $region10: #{custom-call.23} parent=5 // pred_check_branch
        %49 = sbr.rel (%p46) target = $region12
      $region11: #{custom-call.23} parent=5 // pred_region
        %s50 = ssub.s32 %s3, 1
      $region12: #{custom-call.23} parent=5 // pred_fallthru
        _
      %p51 = scmp.lt.s32.totalorder %s3, 4
      // Predicated region
      $region13: #{custom-call.23} parent=5 // pred_check
        %p52 = pneg %p51
      $region14: #{custom-call.23} parent=5 // pred_check_branch
        %54 = sbr.rel (%p52) target = $region16
      $region15: #{custom-call.23} parent=5 // pred_region
        %s55 = sand.u32 %s3, 1
        %s56 = sand.u32 %s3, 1
        %s57 = smul.addr %s56, 4
        %s58 = scalar_lea.vmem [#allocation1], %s57
        %s59 = sadd.s32 %s14, %s13
        %s60 = sadd.s32 %s59, %s12
        %s61 = sadd.s32 %s60, %s11
        %s62 = smul.addr %s10, 2
        %s63 = sadd.s32 %s61, %s62
        %s64 = smul.addr %s63, 4
        %s65 = scalar_lea.vmem %s0, %s64
        // Predicated region
        $region17: #{custom-call.23} parent=15 // pred_check
          _
        $region18: #{custom-call.23} parent=15 // pred_check_branch
          %67 = sbr.rel (0) target = $region20
        $region19: #{custom-call.23} parent=15 // pred_region
          // Predicated region
          $region21: #{custom-call.23} parent=19 // pred_check
            _
          $region22: #{custom-call.23} parent=19 // pred_check_branch
            %69 = sbr.rel target = $region24
          $region23: #{custom-call.23} parent=19 // pred_region
            // Predicated region
            $region36: #{custom-call.23} parent=23 // pred_check
              _
            $region37: #{custom-call.23} parent=23 // pred_check_branch
              %85 = sbr.rel (0) target = $region39
            $region38: #{custom-call.23} parent=23 // pred_region
              %s87 = ssub.s32 16, 1
              loop: start=0, step=1, limit=1
              $region40: #{custom-call.23} parent=38 // loop_pre_header
                _
              $region41: #{custom-call.23} parent=38 // loop_header
                %s89 = sphi 0, %s93
                %p90 = scmp.ge.s32.totalorder %s89, 1
                %s94 = sphi %s65, %s65
                %s95 = sphi %s58, %s58
              $region42: #{custom-call.23} parent=38 // loop_header_branch
                %92 = sbr.rel (%p90) target = $region46
              $region43: #{custom-call.23} parent=38 // loop_body
                %v96 = vld [vmem:[%s94] sm:%s87]
                %97 = vst [vmem:[%s95] sm:%s87] %v96
              $region44: #{custom-call.23} parent=38 // loop_footer
                %s93 = sadd.s32 1, %s89
              $region45: #{custom-call.23} parent=38 // loop_footer_branch
                %88 = sbr.rel target = $region41
              $region46: #{custom-call.23} parent=38 // loop_exit
                _
            $region39: #{custom-call.23} parent=23 // pred_fallthru
              _
          $region24: #{custom-call.23} parent=19 // pred_fallthru
            _
          // Predicated region
          $region25: #{custom-call.23} parent=19 // pred_check
            _
          $region26: #{custom-call.23} parent=19 // pred_check_branch
            %71 = sbr.rel (0) target = $region28
          $region27: #{custom-call.23} parent=19 // pred_region
            %s73 = ssub.s32 16, 1
            loop: start=0, step=1, limit=1
            $region29: #{custom-call.23} parent=27 // loop_pre_header
              _
            $region30: #{custom-call.23} parent=27 // loop_header
              %s75 = sphi 0, %s79
              %p76 = scmp.ge.s32.totalorder %s75, 1
              %s80 = sphi %s65, %s65
              %s81 = sphi %s58, %s58
            $region31: #{custom-call.23} parent=27 // loop_header_branch
              %78 = sbr.rel (%p76) target = $region35
            $region32: #{custom-call.23} parent=27 // loop_body
              %v82 = vld [vmem:[%s80] sm:%s73]
              %83 = vst [vmem:[%s81] sm:%s73] %v82
            $region33: #{custom-call.23} parent=27 // loop_footer
              %s79 = sadd.s32 1, %s75
            $region34: #{custom-call.23} parent=27 // loop_footer_branch
              %74 = sbr.rel target = $region30
            $region35: #{custom-call.23} parent=27 // loop_exit
              _
          $region28: #{custom-call.23} parent=19 // pred_fallthru
            _
        $region20: #{custom-call.23} parent=15 // pred_fallthru
          _
        %98 = vnop
      $region16: #{custom-call.23} parent=5 // pred_fallthru
        _
      %p99 = scmp.le.s32.totalorder 1, %s3
      %p100 = scmp.lt.s32.totalorder %s3, 5
      %p101 = pnand %p99, %p100
      %p102 = pneg %p101
      // Predicated region
      $region47: #{custom-call.23} parent=5 // pred_check
        _
      $region48: #{custom-call.23} parent=5 // pred_check_branch
        %104 = sbr.rel (%p101) target = $region50
      $region49: #{custom-call.23} parent=5 // pred_region
        #allocation4 [shape = 'f32[3,3]{1,0}', space=vmem, size = 0x1000, scoped, tag = 'rescaled input a']
        %s105 = ssub.s32 %s3, 1
        %s106 = sand.u32 %s8, 1
        %s107 = sand.u32 %s8, 1
        %s108 = smul.addr %s107, 4
        %s109 = scalar_lea.vmem [#allocation1], %s108
        %s110 = sand.u32 %s8, 1
        %s111 = sand.u32 %s8, 1
        %s112 = smul.addr %s111, 4
        %s113 = scalar_lea.vmem [#allocation1], %s112
        %s114 = sand.u32 %s8, 1
        %s115 = sand.u32 %s8, 1
        %s116 = smul.addr %s115, 4
        %s117 = scalar_lea.vmem [#allocation3], %s116
        %s119 = sshll.u32 1, 4
        %s120 = ssub.s32 %s119, 1
        %v121 = vld [vmem:[%s113] sm:%s120]
        %122 = vst [vmem:[#allocation0] sm:%s120] %v121
        %v123 = vlaneseq
        %v124 = vand.u32 %v123, 127
        %vm125 = vcmp.lt.s32.totalorder %v124, 3
        %v126 = vlaneseq
        %v127 = vshrl.u32 %v126, 7
        %vm129 = vcmp.eq.s32.totalorder %v127, %v124
        %v130 = vld [vmem:[#allocation0] sm:$0xff]
        %v131 = vsel %vm129, %v130, 0.0
        %132 = vadd.xlane.f32.xlu0 %v131
        %v133 = vpop.xlane.xlu0 %132
        %vm134 = vcmp.le.s32.totalorder %v127, %v124
        %vm135 = vmand %vm134, %vm125
        %v136 = vsel %vm135, %v130, 0.0
        %v137 = vrcp.pop %v133
        %v138 = vmul.f32 %v136, %v137
        %139 = vst [vmem:[#allocation4] sm:$0xff] %v138
        %v140 = vlaneseq
        %v141 = vand.u32 %v140, 127
        %v142 = vlaneseq
        %v143 = vshrl.u32 %v142, 7
        %vm145 = vcmp.eq.s32.totalorder %v141, %v143
        %v146 = vlaneseq
        %v147 = vand.u32 %v146, 127
        %vm148 = vcmp.eq.s32.totalorder %v147, 2
        %v149 = vsel %vm148, 1.0, -1.0
        %v150 = vsel %vm145, %v149, 0.0
        %s151 = scalar_lea.vmem [#allocation4], 1
        %v152 = vld [vmem:[%s151] ss:$0 sm:$0xff]
        %v153 = vxor.u32 %v152, 2147483648
        %v154 = vlaneseq
        %v155 = vand.u32 %v154, 127
        %vm156 = vcmp.eq.s32.totalorder %v155, 1
        %v157 = vmul.f32 %v153, %v150
        %158 = vadd.xlane.f32.xlu0 %v157
        %v159 = vpop.xlane.xlu0 %158
        %v160 = vsel %vm156, %v159, %v150
        %v161 = vld [vmem:[#allocation4] ss:$0 sm:$0xff]
        %v162 = vxor.u32 %v161, 2147483648
        %v163 = vlaneseq
        %v164 = vand.u32 %v163, 127
        %vm165 = vcmp.eq.s32.totalorder %v164, 0
        %v166 = vmul.f32 %v162, %v160
        %167 = vadd.xlane.f32.xlu0 %v166
        %v168 = vpop.xlane.xlu0 %167
        %v169 = vsel %vm165, %v168, %v160
        %v170 = vrcp.pop %v133
        %v171 = vmul.f32 %v169, %v170
        %vm172 = vweird.f32 %v133
        %v173 = vsel %vm172, %v169, %v171
        %174 = vst [vmem:[#allocation2] sm:$0xff] %v173
        %s176 = sshll.u32 1, 4
        %s177 = ssub.s32 %s176, 1
        %v179 = vld [vmem:[#allocation2] sm:%s177]
        %s180 = sshll.u32 1, 4
        %s181 = ssub.s32 %s180, 1
        %182 = vst [vmem:[%s117] sm:%s181] %v179
        %s183 = sand.u32 %s8, 1
        %s184 = sand.u32 %s8, 1
        %s185 = smul.addr %s184, 4
        %s186 = scalar_lea.vmem [#allocation3], %s185
        %s187 = sadd.s32 %s19, %s18
        %s188 = sadd.s32 %s187, %s17
        %s189 = sadd.s32 %s188, %s16
        %s190 = smul.addr %s15, 2
        %s191 = sadd.s32 %s189, %s190
        %s192 = smul.addr %s191, 4
        %s193 = scalar_lea.vmem %s1, %s192
        // Predicated region
        $region51: #{custom-call.23} parent=49 // pred_check
          _
        $region52: #{custom-call.23} parent=49 // pred_check_branch
          %195 = sbr.rel (0) target = $region54
        $region53: #{custom-call.23} parent=49 // pred_region
          // Predicated region
          $region55: #{custom-call.23} parent=53 // pred_check
            _
          $region56: #{custom-call.23} parent=53 // pred_check_branch
            %197 = sbr.rel target = $region58
          $region57: #{custom-call.23} parent=53 // pred_region
            // Predicated region
            $region70: #{custom-call.23} parent=57 // pred_check
              _
            $region71: #{custom-call.23} parent=57 // pred_check_branch
              %213 = sbr.rel (0) target = $region73
            $region72: #{custom-call.23} parent=57 // pred_region
              %s215 = ssub.s32 16, 1
              loop: start=0, step=1, limit=1
              $region74: #{custom-call.23} parent=72 // loop_pre_header
                _
              $region75: #{custom-call.23} parent=72 // loop_header
                %s217 = sphi 0, %s221
                %p218 = scmp.ge.s32.totalorder %s217, 1
                %s222 = sphi %s186, %s186
                %s223 = sphi %s193, %s193
              $region76: #{custom-call.23} parent=72 // loop_header_branch
                %220 = sbr.rel (%p218) target = $region80
              $region77: #{custom-call.23} parent=72 // loop_body
                %v224 = vld [vmem:[%s222] sm:%s215]
                %225 = vst [vmem:[%s223] sm:%s215] %v224
              $region78: #{custom-call.23} parent=72 // loop_footer
                %s221 = sadd.s32 1, %s217
              $region79: #{custom-call.23} parent=72 // loop_footer_branch
                %216 = sbr.rel target = $region75
              $region80: #{custom-call.23} parent=72 // loop_exit
                _
            $region73: #{custom-call.23} parent=57 // pred_fallthru
              _
          $region58: #{custom-call.23} parent=53 // pred_fallthru
            _
          // Predicated region
          $region59: #{custom-call.23} parent=53 // pred_check
            _
          $region60: #{custom-call.23} parent=53 // pred_check_branch
            %199 = sbr.rel (0) target = $region62
          $region61: #{custom-call.23} parent=53 // pred_region
            %s201 = ssub.s32 16, 1
            loop: start=0, step=1, limit=1
            $region63: #{custom-call.23} parent=61 // loop_pre_header
              _
            $region64: #{custom-call.23} parent=61 // loop_header
              %s203 = sphi 0, %s207
              %p204 = scmp.ge.s32.totalorder %s203, 1
              %s208 = sphi %s186, %s186
              %s209 = sphi %s193, %s193
            $region65: #{custom-call.23} parent=61 // loop_header_branch
              %206 = sbr.rel (%p204) target = $region69
            $region66: #{custom-call.23} parent=61 // loop_body
              %v210 = vld [vmem:[%s208] sm:%s201]
              %211 = vst [vmem:[%s209] sm:%s201] %v210
            $region67: #{custom-call.23} parent=61 // loop_footer
              %s207 = sadd.s32 1, %s203
            $region68: #{custom-call.23} parent=61 // loop_footer_branch
              %202 = sbr.rel target = $region64
            $region69: #{custom-call.23} parent=61 // loop_exit
              _
          $region62: #{custom-call.23} parent=53 // pred_fallthru
            _
        $region54: #{custom-call.23} parent=49 // pred_fallthru
          _
        %226 = vnop
      $region50: #{custom-call.23} parent=5 // pred_fallthru
        _
      %p227 = scmp.le.s32.totalorder 2, %s3
      // Predicated region
      $region81: #{custom-call.23} parent=5 // pred_check
        %p228 = pneg %p227
      $region82: #{custom-call.23} parent=5 // pred_check_branch
        %230 = sbr.rel (%p228) target = $region84
      $region83: #{custom-call.23} parent=5 // pred_region
        %s231 = ssub.s32 %s3, 2
        %s232 = sand.u32 %s9, 1
        %s233 = sand.u32 %s9, 1
        %s234 = smul.addr %s233, 4
        %s235 = scalar_lea.vmem [#allocation3], %s234
      $region84: #{custom-call.23} parent=5 // pred_fallthru
        _
    $region6: #{custom-call.23} parent=1 // loop_footer
      %s7 = sadd.s32 1, %s3
    $region7: #{custom-call.23} parent=1 // loop_footer_branch
      %2 = sbr.rel target = $region3
    $region8: #{custom-call.23} parent=1 // loop_exit
      _

// kernel: tile.18
$region0: #{tile.18}
  #allocation0 [shape = 's32[1]{0}', space=sflag, size = 0x4, scoped, tag = 'scoped memory for tile.18']
  %s0 = inlined_call_operand.vmem [shape: f32[16], index: 0, kind: input, shape index: {}]
  %s1 = inlined_call_operand.vmem [shape: f32[8,16], index: 1, kind: output, shape index: {}]
  // Predicated region
  $region2: #{tile.18} parent=0 // pred_check
    _
  $region3: #{tile.18} parent=0 // pred_check_branch
    %3 = sbr.rel (0) target = $region5
  $region4: #{tile.18} parent=0 // pred_region
    _
  $region5: #{tile.18} parent=0 // pred_fallthru
    _
  %v4 = vld [vmem:[%s0] ss:$0 sm:$0xff]
  %5 = vst [vmem:[%s1] sm:$0xff] %v4

// kernel: tile.19
$region0: #{tile.19}
  %s0 = inlined_call_operand.vmem [shape: f32[8,16], index: 0, kind: input, shape index: {}]
  %s1 = inlined_call_operand.vmem [shape: f32[128], index: 1, kind: output, shape index: {}]
  $region1: #{tile.19} parent=0
    #allocation0 [shape = 'u8[4096]{0}', space=vmem, size = 0x1000, scoped, tag = 'scoped mem for output reshape']
    %v2 = vld [vmem:[%s0] sm:$0x1]
    %vm3 = vcmask 130048
    %4 = vst.msk [vmem:[#allocation0] sm:$0x1] %vm3, %v2
    %s5 = scalar_lea.vmem %s0, 7
    %v6 = vld [vmem:[%s5] sm:$0x1]
    %7 = vrot.lane.b32.xlu0 %v6, 112
    %v8 = vpop.permute.xlu0 %7
    %vm9 = vcmask 1048448
    %10 = vst.msk [vmem:[#allocation0] sm:$0x1] %vm9, %v8
    %s11 = scalar_lea.vmem %s0, 6
    %v12 = vld [vmem:[%s11] sm:$0x1]
    %13 = vrot.lane.b32.xlu0 %v12, 96
    %v14 = vpop.permute.xlu0 %13
    %vm15 = vcmask 917248
    %16 = vst.msk [vmem:[#allocation0] sm:$0x1] %vm15, %v14
    %s17 = scalar_lea.vmem %s0, 5
    %v18 = vld [vmem:[%s17] sm:$0x1]
    %19 = vrot.lane.b32.xlu0 %v18, 80
    %v20 = vpop.permute.xlu0 %19
    %vm21 = vcmask 786048
    %22 = vst.msk [vmem:[#allocation0] sm:$0x1] %vm21, %v20
    %s23 = scalar_lea.vmem %s0, 4
    %v24 = vld [vmem:[%s23] sm:$0x1]
    %25 = vrot.lane.b32.xlu0 %v24, 64
    %v26 = vpop.permute.xlu0 %25
    %vm27 = vcmask 654848
    %28 = vst.msk [vmem:[#allocation0] sm:$0x1] %vm27, %v26
    %s29 = scalar_lea.vmem %s0, 3
    %v30 = vld [vmem:[%s29] sm:$0x1]
    %31 = vrot.lane.b32.xlu0 %v30, 48
    %v32 = vpop.permute.xlu0 %31
    %vm33 = vcmask 523648
    %34 = vst.msk [vmem:[#allocation0] sm:$0x1] %vm33, %v32
    %s35 = scalar_lea.vmem %s0, 2
    %v36 = vld [vmem:[%s35] sm:$0x1]
    %37 = vrot.lane.b32.xlu0 %v36, 32
    %v38 = vpop.permute.xlu0 %37
    %vm39 = vcmask 392448
    %40 = vst.msk [vmem:[#allocation0] sm:$0x1] %vm39, %v38
    %s41 = scalar_lea.vmem %s0, 1
    %v42 = vld [vmem:[%s41] sm:$0x1]
    %43 = vrot.lane.b32.xlu0 %v42, 16
    %v44 = vpop.permute.xlu0 %43
    %vm45 = vcmask 261248
    %46 = vst.msk [vmem:[#allocation0] sm:$0x1] %vm45, %v44
    %s48 = sshll.u32 1, 1
    %s49 = ssub.s32 %s48, 1
    %v51 = vld [vmem:[#allocation0] sm:%s49]
    %s52 = sshll.u32 1, 1
    %s53 = ssub.s32 %s52, 1
    %54 = vst [vmem:[%s1] sm:%s53] %v51

// kernel: _lambda_.2
$region0: #{_lambda_.2}
  #allocation0 [shape = 'u32[]', space=smem, size = 0x4, offset = 0x4, fixed_abs, tag = 'smem constant byte address 0x4 - core index']
  #allocation1 [shape = 'u32[144,128]{1,0:T(1,128)}', space=vmem, size = 0x12000, scoped, tag = 'internal scratch']
  %s0 = inlined_call_operand.vmem [shape: f32[64,32], index: 0, kind: input, shape index: {}]
  %s1 = inlined_call_operand.vmem [shape: f32[32,136], index: 1, kind: input, shape index: {}]
  %s2 = inlined_call_operand.vmem [shape: f32[1,136], index: 2, kind: input, shape index: {}]
  %s3 = inlined_call_operand.vmem [shape: f32[8,128], index: 3, kind: input, shape index: {}]
  %s4 = inlined_call_operand.vmem [shape: f32[64,128], index: 4, kind: output, shape index: {}]
  %s5 = sld [smem:[#allocation0]]
  $region26: #{_lambda_.2} parent=0
    _
  %s7 = ssub.s32 1, %s5
  %s8 = scalar_select 0, %s7, %s5
  // Predicated region
  $region2: #{_lambda_.2} parent=0 // pred_check
    _
  $region3: #{_lambda_.2} parent=0 // pred_check_branch
    %10 = sbr.rel (0) target = $region5
  $region4: #{_lambda_.2} parent=0 // pred_region
    _
  $region5: #{_lambda_.2} parent=0 // pred_fallthru
    _
  // Predicated region
  $region6: #{_lambda_.2} parent=0 // pred_check
    _
  $region7: #{_lambda_.2} parent=0 // pred_check_branch
    %12 = sbr.rel (0) target = $region9
  $region8: #{_lambda_.2} parent=0 // pred_region
    _
  $region9: #{_lambda_.2} parent=0 // pred_fallthru
    _
  // Predicated region
  $region10: #{_lambda_.2} parent=0 // pred_check
    _
  $region11: #{_lambda_.2} parent=0 // pred_check_branch
    %14 = sbr.rel (0) target = $region13
  $region12: #{_lambda_.2} parent=0 // pred_region
    _
  $region13: #{_lambda_.2} parent=0 // pred_fallthru
    _
  // Predicated region
  $region14: #{_lambda_.2} parent=0 // pred_check
    _
  $region15: #{_lambda_.2} parent=0 // pred_check_branch
    %16 = sbr.rel (0) target = $region17
  $region16: #{_lambda_.2} parent=0 // pred_region
    _
  $region17: #{_lambda_.2} parent=0 // pred_fallthru
    _
  %v17 = vld [vmem:[%s0] sm:$0xff]
  %v18 = vld [vmem:[%s0 + $0x8] sm:$0xff]
  %v19 = vld [vmem:[%s0 + $0x10] sm:$0xff]
  %v20 = vld [vmem:[%s0 + $0x18] sm:$0xff]
  %v21 = vld [vmem:[%s0 + $0x20] sm:$0xff]
  %v22 = vld [vmem:[%s0 + $0x28] sm:$0xff]
  %v23 = vld [vmem:[%s0 + $0x30] sm:$0xff]
  %v24 = vld [vmem:[%s0 + $0x38] sm:$0xff]
  %v25 = vld [vmem:[%s1] sm:$0xff]
  %v26 = vld [vmem:[%s1 + $0x8] sm:$0xff]
  %v27 = vld [vmem:[%s1 + $0x10] sm:$0xff]
  %v28 = vld [vmem:[%s1 + $0x18] sm:$0xff]
  %v29 = vld [vmem:[%s1 + $0x20] sm:$0xff]
  %v30 = vld [vmem:[%s1 + $0x28] sm:$0xff]
  %v31 = vld [vmem:[%s1 + $0x30] sm:$0xff]
  %v32 = vld [vmem:[%s1 + $0x38] sm:$0xff]
  %v33 = vld [vmem:[%s2] sm:$0x3]
  %v35 = vlaneseq
  %v36 = vshrl.u32 %v35, 7
  %v37 = vsub.s32 0, %v36
  %v38 = vrot.slane %v33, %v37
  %v39 = vlaneseq
  %v40 = vshrl.u32 %v39, 7
  %v41 = vsub.s32 1, %v40
  %v42 = vrot.slane %v33, %v41
  %vm45 = vcmask 261120
  %v47 = vsel %vm45, %v17, 0
  %v50 = vsel %vm45, %v18, 0
  %v53 = vsel %vm45, %v19, 0
  %v56 = vsel %vm45, %v20, 0
  %v59 = vsel %vm45, %v21, 0
  %v62 = vsel %vm45, %v22, 0
  %v65 = vsel %vm45, %v23, 0
  %v68 = vsel %vm45, %v24, 0
  %70 = vmatprep.subr.mxu0 0.0
  %71 = vmatpush1.msra.mxu0 0.0
  %72 = vmatprep.subr.mxu0 0.0
  %73 = vmatpush1.msra.mxu0 0.0
  %74 = vmatprep.subr.mxu0 0.0
  %75 = vmatpush1.msra.mxu0 0.0
  %76 = vmatprep.subr.mxu0 0.0
  %77 = vmatpush1.msra.mxu0 0.0
  %78 = vmatprep.subr.mxu0 0.0
  %79 = vmatpush1.msra.mxu0 0.0
  %80 = vmatprep.subr.mxu0 0.0
  %81 = vmatpush1.msra.mxu0 0.0
  %82 = vmatprep.subr.mxu0 0.0
  %83 = vmatpush1.msra.mxu0 0.0
  %84 = vmatprep.subr.mxu0 0.0
  %85 = vmatpush1.msra.mxu0 0.0
  %86 = vmatprep.subr.mxu0 0.0
  %87 = vmatpush1.msra.mxu0 0.0
  %88 = vmatprep.subr.mxu0 0.0
  %89 = vmatpush1.msra.mxu0 0.0
  %90 = vmatprep.subr.mxu0 0.0
  %91 = vmatpush1.msra.mxu0 0.0
  %92 = vmatprep.subr.mxu0 0.0
  %93 = vmatpush1.msra.mxu0 0.0
  %94 = vmatprep.subr.mxu0 %v32
  %95 = vmatpush1.msra.mxu0 %v31
  %96 = vmatprep.subr.mxu0 %v30
  %97 = vmatpush1.msra.mxu0 %v29
  %98 = vmatprep.subr.mxu0 %v28
  %99 = vmatpush1.msra.mxu0 %v27
  %100 = vmatprep.subr.mxu0 %v26
  %101 = vmatpush1.msra.mxu0 %v25
  %102 = vmatprep.subr.mxu0 0.0
  %103 = vmatpush2.msra.mxu0 0.0
  %104 = vmatprep.subr.mxu0 0.0
  %105 = vmatpush2.msra.mxu0 0.0
  %106 = vmatprep.subr.mxu0 0.0
  %107 = vmatpush2.msra.mxu0 0.0
  %108 = vmatprep.subr.mxu0 0.0
  %109 = vmatpush2.msra.mxu0 0.0
  %110 = vmatprep.subr.mxu0 0.0
  %111 = vmatpush2.msra.mxu0 0.0
  %112 = vmatprep.subr.mxu0 0.0
  %113 = vmatpush2.msra.mxu0 0.0
  %114 = vmatprep.subr.mxu0 0.0
  %115 = vmatpush2.msra.mxu0 0.0
  %116 = vmatprep.subr.mxu0 0.0
  %117 = vmatpush2.msra.mxu0 0.0
  %118 = vmatprep.subr.mxu0 0.0
  %119 = vmatpush2.msra.mxu0 0.0
  %120 = vmatprep.subr.mxu0 0.0
  %121 = vmatpush2.msra.mxu0 0.0
  %122 = vmatprep.subr.mxu0 0.0
  %123 = vmatpush2.msra.mxu0 0.0
  %124 = vmatprep.subr.mxu0 0.0
  %125 = vmatpush2.msra.mxu0 0.0
  %126 = vmatprep.subr.mxu0 0.0
  %127 = vmatpush2.msra.mxu0 0.0
  %128 = vmatprep.subr.mxu0 0.0
  %129 = vmatpush2.msra.mxu0 0.0
  %130 = vmatprep.subr.mxu0 0.0
  %131 = vmatpush2.msra.mxu0 0.0
  %132 = vmatprep.subr.mxu0 0.0
  %133 = vmatpush2.msra.mxu0 0.0
  %134 = vmatprep.mubr.f32.mxu0 0.0
  %135 = vmatmul.mubr.f32.gmra.mxu0 %v47
  %v136 = vpop.f32.mrf.mxu0
  %v137 = vadd.f32 %v38, %v136
  %v138 = vpop.f32.mrf.mxu0
  %v139 = vadd.f32 %v42, %v138
  %140 = vmatprep.mubr.f32.mxu0 0.0
  %141 = vmatmul.mubr.f32.gmra.mxu0 %v50
  %v142 = vpop.f32.mrf.mxu0
  %v143 = vadd.f32 %v38, %v142
  %v144 = vpop.f32.mrf.mxu0
  %v145 = vadd.f32 %v42, %v144
  %146 = vmatprep.mubr.f32.mxu0 0.0
  %147 = vmatmul.mubr.f32.gmra.mxu0 %v53
  %v148 = vpop.f32.mrf.mxu0
  %v149 = vadd.f32 %v38, %v148
  %v150 = vpop.f32.mrf.mxu0
  %v151 = vadd.f32 %v42, %v150
  %152 = vmatprep.mubr.f32.mxu0 0.0
  %153 = vmatmul.mubr.f32.gmra.mxu0 %v56
  %v154 = vpop.f32.mrf.mxu0
  %v155 = vadd.f32 %v38, %v154
  %v156 = vpop.f32.mrf.mxu0
  %v157 = vadd.f32 %v42, %v156
  %158 = vmatprep.mubr.f32.mxu0 0.0
  %159 = vmatmul.mubr.f32.gmra.mxu0 %v59
  %v160 = vpop.f32.mrf.mxu0
  %v161 = vadd.f32 %v38, %v160
  %v162 = vpop.f32.mrf.mxu0
  %v163 = vadd.f32 %v42, %v162
  %164 = vmatprep.mubr.f32.mxu0 0.0
  %165 = vmatmul.mubr.f32.gmra.mxu0 %v62
  %v166 = vpop.f32.mrf.mxu0
  %v167 = vadd.f32 %v38, %v166
  %v168 = vpop.f32.mrf.mxu0
  %v169 = vadd.f32 %v42, %v168
  %170 = vmatprep.mubr.f32.mxu0 0.0
  %171 = vmatmul.mubr.f32.gmra.mxu0 %v65
  %v172 = vpop.f32.mrf.mxu0
  %v173 = vadd.f32 %v38, %v172
  %v174 = vpop.f32.mrf.mxu0
  %v175 = vadd.f32 %v42, %v174
  %176 = vmatprep.mubr.f32.mxu0 0.0
  %177 = vmatmul.mubr.f32.gmra.mxu0 %v68
  %v178 = vpop.f32.mrf.mxu0
  %v179 = vadd.f32 %v38, %v178
  %v180 = vpop.f32.mrf.mxu0
  %v181 = vadd.f32 %v42, %v180
  %182 = vdwg.mxu0
  %vm183 = vcmask 64512
  %v184 = vsel %vm183, %v139, -inf
  %185 = vmax.xlane.f32.xlu0 %v184
  %v186 = vpop.xlane.xlu0 %185
  %v187 = vsel %vm183, %v145, -inf
  %188 = vmax.xlane.f32.xlu0 %v187
  %v189 = vpop.xlane.xlu0 %188
  %v190 = vsel %vm183, %v151, -inf
  %191 = vmax.xlane.f32.xlu0 %v190
  %v192 = vpop.xlane.xlu0 %191
  %v193 = vsel %vm183, %v157, -inf
  %194 = vmax.xlane.f32.xlu0 %v193
  %v195 = vpop.xlane.xlu0 %194
  %v196 = vsel %vm183, %v163, -inf
  %197 = vmax.xlane.f32.xlu0 %v196
  %v198 = vpop.xlane.xlu0 %197
  %v199 = vsel %vm183, %v169, -inf
  %200 = vmax.xlane.f32.xlu0 %v199
  %v201 = vpop.xlane.xlu0 %200
  %v202 = vsel %vm183, %v175, -inf
  %203 = vmax.xlane.f32.xlu0 %v202
  %v204 = vpop.xlane.xlu0 %203
  %v205 = vsel %vm183, %v181, -inf
  %206 = vmax.xlane.f32.xlu0 %v205
  %v207 = vpop.xlane.xlu0 %206
  %v208 = vsub.f32 %v139, %v186
  %v209 = vsub.f32 %v145, %v189
  %v210 = vsub.f32 %v151, %v192
  %v211 = vsub.f32 %v157, %v195
  %v212 = vsub.f32 %v163, %v198
  %v213 = vsub.f32 %v169, %v201
  %v214 = vsub.f32 %v175, %v204
  %v215 = vsub.f32 %v181, %v207
  %v216 = vmul.f32 %v208, 1.442695
  %v217 = vpow.pop %v216
  %v218 = vmul.f32 %v209, 1.442695
  %v219 = vpow.pop %v218
  %v220 = vmul.f32 %v210, 1.442695
  %v221 = vpow.pop %v220
  %v222 = vmul.f32 %v211, 1.442695
  %v223 = vpow.pop %v222
  %v224 = vmul.f32 %v212, 1.442695
  %v225 = vpow.pop %v224
  %v226 = vmul.f32 %v213, 1.442695
  %v227 = vpow.pop %v226
  %v228 = vmul.f32 %v214, 1.442695
  %v229 = vpow.pop %v228
  %v230 = vmul.f32 %v215, 1.442695
  %v231 = vpow.pop %v230
  %v232 = vsel %vm183, %v217, 0.0
  %233 = vadd.xlane.f32.xlu0 %v232
  %v234 = vpop.xlane.xlu0 %233
  %v235 = vsel %vm183, %v219, 0.0
  %236 = vadd.xlane.f32.xlu0 %v235
  %v237 = vpop.xlane.xlu0 %236
  %v238 = vsel %vm183, %v221, 0.0
  %239 = vadd.xlane.f32.xlu0 %v238
  %v240 = vpop.xlane.xlu0 %239
  %v241 = vsel %vm183, %v223, 0.0
  %242 = vadd.xlane.f32.xlu0 %v241
  %v243 = vpop.xlane.xlu0 %242
  %v244 = vsel %vm183, %v225, 0.0
  %245 = vadd.xlane.f32.xlu0 %v244
  %v246 = vpop.xlane.xlu0 %245
  %v247 = vsel %vm183, %v227, 0.0
  %248 = vadd.xlane.f32.xlu0 %v247
  %v249 = vpop.xlane.xlu0 %248
  %v250 = vsel %vm183, %v229, 0.0
  %251 = vadd.xlane.f32.xlu0 %v250
  %v252 = vpop.xlane.xlu0 %251
  %v253 = vsel %vm183, %v231, 0.0
  %254 = vadd.xlane.f32.xlu0 %v253
  %v255 = vpop.xlane.xlu0 %254
  %v256 = vrcp.pop %v234
  %v257 = vrcp.pop %v237
  %v258 = vrcp.pop %v240
  %v259 = vrcp.pop %v243
  %v260 = vrcp.pop %v246
  %v261 = vrcp.pop %v249
  %v262 = vrcp.pop %v252
  %v263 = vrcp.pop %v255
  %v264 = vmul.f32 %v217, %v256
  %v265 = vmul.f32 %v219, %v257
  %v266 = vmul.f32 %v221, %v258
  %v267 = vmul.f32 %v223, %v259
  %v268 = vmul.f32 %v225, %v260
  %v269 = vmul.f32 %v227, %v261
  %v270 = vmul.f32 %v229, %v262
  %v271 = vmul.f32 %v231, %v263
  %v272 = vld [vmem:[%s3] sm:$0xff]
  %v274 = vsel %vm183, %v264, 0
  %v277 = vsel %vm183, %v265, 0
  %v280 = vsel %vm183, %v266, 0
  %v283 = vsel %vm183, %v267, 0
  %v286 = vsel %vm183, %v268, 0
  %v289 = vsel %vm183, %v269, 0
  %v292 = vsel %vm183, %v270, 0
  %v295 = vsel %vm183, %v271, 0
  %297 = vmatprep.subr.mxu0 0.0
  %298 = vmatpush1.msra.mxu0 0.0
  %299 = vmatprep.subr.mxu0 0.0
  %300 = vmatpush1.msra.mxu0 0.0
  %301 = vmatprep.subr.mxu0 0.0
  %302 = vmatpush1.msra.mxu0 0.0
  %303 = vmatprep.subr.mxu0 0.0
  %304 = vmatpush1.msra.mxu0 0.0
  %305 = vmatprep.subr.mxu0 0.0
  %306 = vmatpush1.msra.mxu0 0.0
  %307 = vmatprep.subr.mxu0 0.0
  %308 = vmatpush1.msra.mxu0 0.0
  %309 = vmatprep.subr.mxu0 0.0
  %310 = vmatpush1.msra.mxu0 0.0
  %311 = vmatprep.subr.mxu0 0.0
  %312 = vmatpush1.msra.mxu0 0.0
  %313 = vmatprep.subr.mxu0 0.0
  %314 = vmatpush1.msra.mxu0 0.0
  %315 = vmatprep.subr.mxu0 0.0
  %316 = vmatpush1.msra.mxu0 0.0
  %317 = vmatprep.subr.mxu0 0.0
  %318 = vmatpush1.msra.mxu0 0.0
  %319 = vmatprep.subr.mxu0 0.0
  %320 = vmatpush1.msra.mxu0 0.0
  %321 = vmatprep.subr.mxu0 0.0
  %322 = vmatpush1.msra.mxu0 0.0
  %323 = vmatprep.subr.mxu0 0.0
  %324 = vmatpush1.msra.mxu0 0.0
  %325 = vmatprep.subr.mxu0 0.0
  %326 = vmatpush1.msra.mxu0 0.0
  %327 = vmatprep.subr.mxu0 0.0
  %328 = vmatpush1.msra.mxu0 %v272
  %329 = vmatprep.subr.mxu0 0.0
  %330 = vmatpush2.msra.mxu0 0.0
  %331 = vmatprep.subr.mxu0 0.0
  %332 = vmatpush2.msra.mxu0 0.0
  %333 = vmatprep.subr.mxu0 0.0
  %334 = vmatpush2.msra.mxu0 0.0
  %335 = vmatprep.subr.mxu0 0.0
  %336 = vmatpush2.msra.mxu0 0.0
  %337 = vmatprep.subr.mxu0 0.0
  %338 = vmatpush2.msra.mxu0 0.0
  %339 = vmatprep.subr.mxu0 0.0
  %340 = vmatpush2.msra.mxu0 0.0
  %341 = vmatprep.subr.mxu0 0.0
  %342 = vmatpush2.msra.mxu0 0.0
  %343 = vmatprep.subr.mxu0 0.0
  %344 = vmatpush2.msra.mxu0 0.0
  %345 = vmatprep.subr.mxu0 0.0
  %346 = vmatpush2.msra.mxu0 0.0
  %347 = vmatprep.subr.mxu0 0.0
  %348 = vmatpush2.msra.mxu0 0.0
  %349 = vmatprep.subr.mxu0 0.0
  %350 = vmatpush2.msra.mxu0 0.0
  %351 = vmatprep.subr.mxu0 0.0
  %352 = vmatpush2.msra.mxu0 0.0
  %353 = vmatprep.subr.mxu0 0.0
  %354 = vmatpush2.msra.mxu0 0.0
  %355 = vmatprep.subr.mxu0 0.0
  %356 = vmatpush2.msra.mxu0 0.0
  %357 = vmatprep.subr.mxu0 0.0
  %358 = vmatpush2.msra.mxu0 0.0
  %359 = vmatprep.subr.mxu0 0.0
  %360 = vmatpush2.msra.mxu0 0.0
  %361 = vmatprep.mubr.f32.mxu0 0.0
  %362 = vmatmul.mubr.f32.gmra.mxu0 %v274
  %v363 = vpop.f32.mrf.mxu0
  %v364 = vadd.f32 0.0, %v363
  %v365 = vpop.f32.mrf.mxu0
  %366 = vmatprep.mubr.f32.mxu0 0.0
  %367 = vmatmul.mubr.f32.gmra.mxu0 %v277
  %v368 = vpop.f32.mrf.mxu0
  %v369 = vadd.f32 0.0, %v368
  %v370 = vpop.f32.mrf.mxu0
  %371 = vmatprep.mubr.f32.mxu0 0.0
  %372 = vmatmul.mubr.f32.gmra.mxu0 %v280
  %v373 = vpop.f32.mrf.mxu0
  %v374 = vadd.f32 0.0, %v373
  %v375 = vpop.f32.mrf.mxu0
  %376 = vmatprep.mubr.f32.mxu0 0.0
  %377 = vmatmul.mubr.f32.gmra.mxu0 %v283
  %v378 = vpop.f32.mrf.mxu0
  %v379 = vadd.f32 0.0, %v378
  %v380 = vpop.f32.mrf.mxu0
  %381 = vmatprep.mubr.f32.mxu0 0.0
  %382 = vmatmul.mubr.f32.gmra.mxu0 %v286
  %v383 = vpop.f32.mrf.mxu0
  %v384 = vadd.f32 0.0, %v383
  %v385 = vpop.f32.mrf.mxu0
  %386 = vmatprep.mubr.f32.mxu0 0.0
  %387 = vmatmul.mubr.f32.gmra.mxu0 %v289
  %v388 = vpop.f32.mrf.mxu0
  %v389 = vadd.f32 0.0, %v388
  %v390 = vpop.f32.mrf.mxu0
  %391 = vmatprep.mubr.f32.mxu0 0.0
  %392 = vmatmul.mubr.f32.gmra.mxu0 %v292
  %v393 = vpop.f32.mrf.mxu0
  %v394 = vadd.f32 0.0, %v393
  %v395 = vpop.f32.mrf.mxu0
  %396 = vmatprep.mubr.f32.mxu0 0.0
  %397 = vmatmul.mubr.f32.gmra.mxu0 %v295
  %v398 = vpop.f32.mrf.mxu0
  %v399 = vadd.f32 0.0, %v398
  %v400 = vpop.f32.mrf.mxu0
  %401 = vdwg.mxu0
  %v402 = vmul.f32 %v364, %v137
  %v403 = vmul.f32 %v369, %v143
  %v404 = vmul.f32 %v374, %v149
  %v405 = vmul.f32 %v379, %v155
  %v406 = vmul.f32 %v384, %v161
  %v407 = vmul.f32 %v389, %v167
  %v408 = vmul.f32 %v394, %v173
  %v409 = vmul.f32 %v399, %v179
  %410 = vst [vmem:[%s4] sm:$0xff] %v402
  %411 = vst [vmem:[%s4 + $0x8] sm:$0xff] %v403
  %412 = vst [vmem:[%s4 + $0x10] sm:$0xff] %v404
  %413 = vst [vmem:[%s4 + $0x18] sm:$0xff] %v405
  %414 = vst [vmem:[%s4 + $0x20] sm:$0xff] %v406
  %415 = vst [vmem:[%s4 + $0x28] sm:$0xff] %v407
  %416 = vst [vmem:[%s4 + $0x30] sm:$0xff] %v408
  %417 = vst [vmem:[%s4 + $0x38] sm:$0xff] %v409
  // Predicated region
  $region18: #{_lambda_.2} parent=0 // pred_check
    _
  $region19: #{_lambda_.2} parent=0 // pred_check_branch
    %419 = sbr.rel (0) target = $region21
  $region20: #{_lambda_.2} parent=0 // pred_region
    _
  $region21: #{_lambda_.2} parent=0 // pred_fallthru
    _
  // Predicated region
  $region22: #{_lambda_.2} parent=0 // pred_check
    _
  $region23: #{_lambda_.2} parent=0 // pred_check_branch
    %421 = sbr.rel (0) target = $region25
  $region24: #{_lambda_.2} parent=0 // pred_region
    _
  $region25: #{_lambda_.2} parent=0 // pred_fallthru
    _

// kernel: _lambda_.3
$region0: #{_lambda_.3}
  #allocation0 [shape = 'u32[]', space=smem, size = 0x4, offset = 0x4, fixed_abs, tag = 'smem constant byte address 0x4 - core index']
  #allocation1 [shape = 'u32[144,128]{1,0:T(1,128)}', space=vmem, size = 0x12000, scoped, tag = 'internal scratch']
  %s0 = inlined_call_operand.vmem [shape: s32[512,1], index: 0, kind: input, shape index: {}]
  %s1 = inlined_call_operand.vmem [shape: f32[16,512], index: 1, kind: input, shape index: {}]
  %s2 = inlined_call_operand.vmem [shape: f32[16,512], index: 2, kind: output, shape index: {}]
  %s3 = sld [smem:[#allocation0]]
  $region64: #{_lambda_.3} parent=0
    _
  %s5 = ssub.s32 1, %s3
  %s6 = scalar_select 0, %s5, %s3
  $region1: #{_lambda_.3} parent=0
    #allocation2 [shape = 'u8[32768]{0}', space=vmem, size = 0x8000, scoped, tag = 'output window, operand 0']
    loop: start=0, step=1, limit=4
    $region2: #{_lambda_.3} parent=1 // loop_pre_header
      _
    $region3: #{_lambda_.3} parent=1 // loop_header
      %s8 = sphi 0, %s12
      %p9 = scmp.ge.s32.totalorder %s8, 4
      %s15 = sphi 0, %s27
      %s16 = sphi 0, %s23
      %s17 = sphi 0, %s15
      %s18 = sphi 0, %s16
      %s19 = sphi 0, %s17
      %s20 = sphi 0, %s18
      %s30 = sphi 0, %s32
      %s33 = sphi 0, %s30
      %s34 = sphi 0, %s33
      %s50 = sphi 0, %s34
      %s56 = sphi 0, %s58
      %s59 = sphi 0, %s56
      %s60 = sphi 0, %s59
      %s76 = sphi 0, %s60
      %s82 = sphi 0, %s84
      %s85 = sphi 0, %s82
      %s86 = sphi 0, %s85
      %s102 = sphi 0, %s86
    $region4: #{_lambda_.3} parent=1 // loop_header_branch
      %11 = sbr.rel (%p9) target = $region8
    $region5: #{_lambda_.3} parent=1 // loop_body
      %s13 = ssub.s32 %s8, 1
      %s14 = ssub.s32 %s8, 2
      %s21 = sadd.s32 1, %s16
      %p22 = scmp.ge.s32.totalorder %s21, 1
      %s23 = scalar_select %p22, 0, %s21
      %s24 = sadd.s32 1, %s15
      %s25 = scalar_select %p22, %s24, %s15
      %p26 = scmp.ge.s32.totalorder %s25, 2
      %s27 = scalar_select %p26, 0, %s25
      %s28 = ssub.s32 %s16, %s23
      %p29 = scmp.eq.s32.totalorder %s28, 0
      %s31 = sadd.s32 %s30, 1
      %s32 = scalar_select %p29, %s30, %s31
      %p35 = pneg %p29
      %p36 = scmp.eq.s32.totalorder %s8, 1
      %p37 = por %p35, %p36
      %p38 = scmp.ne.s32.totalorder %s30, %s33
      %p39 = scmp.eq.s32.totalorder %s8, 0
      %p40 = por %p38, %p39
      %p41 = scmp.ne.s32.totalorder %s30, %s33
      %p42 = scmp.eq.s32.totalorder %s13, 1
      %p43 = por %p41, %p42
      %p44 = scmp.ne.s32.totalorder %s33, %s34
      %p45 = scmp.eq.s32.totalorder %s13, 0
      %p46 = por %p44, %p45
      %p47 = scmp.ne.s32.totalorder %s33, %s34
      %p48 = scmp.eq.s32.totalorder %s14, 1
      %p49 = por %p47, %p48
      %p51 = scmp.ne.s32.totalorder %s34, %s50
      %p52 = scmp.eq.s32.totalorder %s14, 0
      %p53 = por %p51, %p52
      %s54 = ssub.s32 %s16, %s23
      %p55 = scmp.eq.s32.totalorder %s54, 0
      %s57 = sadd.s32 %s56, 1
      %s58 = scalar_select %p55, %s56, %s57
      %p61 = pneg %p55
      %p62 = scmp.eq.s32.totalorder %s8, 1
      %p63 = por %p61, %p62
      %p64 = scmp.ne.s32.totalorder %s56, %s59
      %p65 = scmp.eq.s32.totalorder %s8, 0
      %p66 = por %p64, %p65
      %p67 = scmp.ne.s32.totalorder %s56, %s59
      %p68 = scmp.eq.s32.totalorder %s13, 1
      %p69 = por %p67, %p68
      %p70 = scmp.ne.s32.totalorder %s59, %s60
      %p71 = scmp.eq.s32.totalorder %s13, 0
      %p72 = por %p70, %p71
      %p73 = scmp.ne.s32.totalorder %s59, %s60
      %p74 = scmp.eq.s32.totalorder %s14, 1
      %p75 = por %p73, %p74
      %p77 = scmp.ne.s32.totalorder %s60, %s76
      %p78 = scmp.eq.s32.totalorder %s14, 0
      %p79 = por %p77, %p78
      %s80 = ssub.s32 %s15, %s27
      %p81 = scmp.eq.s32.totalorder %s80, 0
      %s83 = sadd.s32 %s82, 1
      %s84 = scalar_select %p81, %s82, %s83
      %p87 = pneg %p81
      %p88 = scmp.eq.s32.totalorder %s8, 1
      %p89 = por %p87, %p88
      %p90 = scmp.ne.s32.totalorder %s82, %s85
      %p91 = scmp.eq.s32.totalorder %s8, 0
      %p92 = por %p90, %p91
      %p93 = scmp.ne.s32.totalorder %s82, %s85
      %p94 = scmp.eq.s32.totalorder %s13, 1
      %p95 = por %p93, %p94
      %p96 = scmp.ne.s32.totalorder %s85, %s86
      %p97 = scmp.eq.s32.totalorder %s13, 0
      %p98 = por %p96, %p97
      %p99 = scmp.ne.s32.totalorder %s85, %s86
      %p100 = scmp.eq.s32.totalorder %s14, 1
      %p101 = por %p99, %p100
      %p103 = scmp.ne.s32.totalorder %s86, %s102
      %p104 = scmp.eq.s32.totalorder %s14, 0
      %p105 = por %p103, %p104
      %p106 = scmp.le.s32.totalorder 1, %s8
      %p107 = scmp.lt.s32.totalorder %s8, 3
      %p108 = pnand %p106, %p107
      %p109 = pneg %p108
      // Predicated region
      $region9: #{_lambda_.3} parent=5 // pred_check
        _
      $region10: #{_lambda_.3} parent=5 // pred_check_branch
        %111 = sbr.rel (%p108) target = $region12
      $region11: #{_lambda_.3} parent=5 // pred_region
        %s112 = ssub.s32 %s8, 1
        // Predicated region
        $region13: #{_lambda_.3} parent=11 // pred_check
          %p113 = pneg %p46
        $region14: #{_lambda_.3} parent=11 // pred_check_branch
          %115 = sbr.rel (%p113) target = $region16
        $region15: #{_lambda_.3} parent=11 // pred_region
          %s116 = smul.u32 64, %s18
          %p117 = scmp.lt.s32.totalorder %s116, 63
          %s118 = scalar_select %p117, %s116, 63
          %s119 = smul.addr %s118, 8
          %s120 = scalar_lea.vmem %s0, %s119
          %s121 = smul.u32 64, %s18
        $region16: #{_lambda_.3} parent=11 // pred_fallthru
          _
        // Predicated region
        $region17: #{_lambda_.3} parent=11 // pred_check
          %p122 = pneg %p72
        $region18: #{_lambda_.3} parent=11 // pred_check_branch
          %124 = sbr.rel (%p122) target = $region20
        $region19: #{_lambda_.3} parent=11 // pred_region
          %s125 = smul.u32 4, %s18
          %p126 = scmp.lt.s32.totalorder %s125, 3
          %s127 = scalar_select %p126, %s125, 3
          %s128 = smul.addr %s127, 8
          %s129 = scalar_lea.vmem %s1, %s128
          %s130 = smul.u32 4, %s18
        $region20: #{_lambda_.3} parent=11 // pred_fallthru
          _
      $region12: #{_lambda_.3} parent=5 // pred_fallthru
        _
      %p131 = scmp.lt.s32.totalorder %s8, 2
      // Predicated region
      $region21: #{_lambda_.3} parent=5 // pred_check
        %p132 = pneg %p131
      $region22: #{_lambda_.3} parent=5 // pred_check_branch
        %134 = sbr.rel (%p132) target = $region24
      $region23: #{_lambda_.3} parent=5 // pred_region
        _
      $region24: #{_lambda_.3} parent=5 // pred_fallthru
        _
      %p135 = scmp.le.s32.totalorder 1, %s8
      %p136 = scmp.lt.s32.totalorder %s8, 3
      %p137 = pnand %p135, %p136
      %p138 = pneg %p137
      // Predicated region
      $region25: #{_lambda_.3} parent=5 // pred_check
        _
      $region26: #{_lambda_.3} parent=5 // pred_check_branch
        %140 = sbr.rel (%p137) target = $region28
      $region27: #{_lambda_.3} parent=5 // pred_region
        %s141 = ssub.s32 %s8, 1
        %s142 = smul.u32 64, %s18
        %p143 = scmp.lt.s32.totalorder %s142, 63
        %s144 = scalar_select %p143, %s142, 63
        %s145 = smul.addr %s144, 8
        %s146 = scalar_lea.vmem %s0, %s145
        %p147 = pneg %p46
        %p148 = pneg %p43
        %s149 = smul.u32 4, %s18
        %p150 = scmp.lt.s32.totalorder %s149, 3
        %s151 = scalar_select %p150, %s149, 3
        %s152 = smul.addr %s151, 8
        %s153 = scalar_lea.vmem %s1, %s152
        %p154 = pneg %p72
        %p155 = pneg %p69
        %p156 = pneg %p98
        %p157 = pneg %p95
        %s158 = sand.u32 %s85, 1
        %s159 = sand.u32 %s85, 1
        %s160 = smul.addr %s159, 32
        %s161 = scalar_lea.vmem [#allocation2], %s160
        %s162 = smul.u32 64, %s18
        %p163 = scmp.lt.s32.totalorder %s162, 63
        %s164 = scalar_select %p163, %s162, 63
        %s165 = smul.addr %s164, 8
        %s166 = scalar_lea.vmem %s0, %s165
        %s167 = smul.u32 64, %s18
        %s168 = smul.u32 4, %s18
        %p169 = scmp.lt.s32.totalorder %s168, 3
        %s170 = scalar_select %p169, %s168, 3
        %s171 = smul.addr %s170, 8
        %s172 = scalar_lea.vmem %s1, %s171
        %s173 = smul.u32 4, %s18
        %s174 = smul.u32 2, %s17
        %p175 = scmp.eq.s32.totalorder %s18, 0
        // Predicated region
        $region29: #{_lambda_.3} parent=27 // pred_check
          %p176 = pneg %p175
        $region30: #{_lambda_.3} parent=27 // pred_check_branch
          %178 = sbr.rel (%p176) target = $region32
        $region31: #{_lambda_.3} parent=27 // pred_region
          %179 = vst [vmem:[%s161] sm:$0xff] 0.0
          %180 = vst [vmem:[%s161 + $0x8] sm:$0xff] 0.0
          %181 = vst [vmem:[%s161 + $0x10] sm:$0xff] 0.0
          %182 = vst [vmem:[%s161 + $0x18] sm:$0xff] 0.0
        $region32: #{_lambda_.3} parent=27 // pred_fallthru
          _
        %s183 = smul.u32 %s17, 256
        %v184 = vlaneseq
        %v185 = vand.u32 %v184, 127
        %v186 = vadd.s32 %v185, 128
        %v187 = vstv %s183
        %v188 = vadd.s32 %v187, %v185
        %v189 = vadd.s32 %v187, %v186
        %v190 = vld [vmem:[%s166] sm:$0xff]
        %v191 = vld [vmem:[%s166 + $0x8] sm:$0xff]
        %v192 = vld [vmem:[%s166 + $0x10] sm:$0xff]
        %v193 = vld [vmem:[%s166 + $0x18] sm:$0xff]
        %v194 = vld [vmem:[%s166 + $0x20] sm:$0xff]
        %v195 = vld [vmem:[%s166 + $0x28] sm:$0xff]
        %v196 = vld [vmem:[%s166 + $0x30] sm:$0xff]
        %v197 = vld [vmem:[%s166 + $0x38] sm:$0xff]
        %v198 = vld [vmem:[%s166 + $0x40] sm:$0xff]
        %v199 = vld [vmem:[%s166 + $0x48] sm:$0xff]
        %v200 = vld [vmem:[%s166 + $0x50] sm:$0xff]
        %v201 = vld [vmem:[%s166 + $0x58] sm:$0xff]
        %v202 = vld [vmem:[%s166 + $0x60] sm:$0xff]
        %v203 = vld [vmem:[%s166 + $0x68] sm:$0xff]
        %v204 = vld [vmem:[%s166 + $0x70] sm:$0xff]
        %v205 = vld [vmem:[%s166 + $0x78] sm:$0xff]
        %206 = vset.pattern.permute.xlu0 0
        %207 = vperm.xlu0 %206, %v190
        %v208 = vpop.permute.xlu0 %207
        %209 = vset.pattern.permute.xlu0 0
        %210 = vperm.xlu0 %209, %v191
        %v211 = vpop.permute.xlu0 %210
        %212 = vset.pattern.permute.xlu0 0
        %213 = vperm.xlu0 %212, %v192
        %v214 = vpop.permute.xlu0 %213
        %215 = vset.pattern.permute.xlu0 0
        %216 = vperm.xlu0 %215, %v193
        %v217 = vpop.permute.xlu0 %216
        %218 = vset.pattern.permute.xlu0 0
        %219 = vperm.xlu0 %218, %v194
        %v220 = vpop.permute.xlu0 %219
        %221 = vset.pattern.permute.xlu0 0
        %222 = vperm.xlu0 %221, %v195
        %v223 = vpop.permute.xlu0 %222
        %224 = vset.pattern.permute.xlu0 0
        %225 = vperm.xlu0 %224, %v196
        %v226 = vpop.permute.xlu0 %225
        %227 = vset.pattern.permute.xlu0 0
        %228 = vperm.xlu0 %227, %v197
        %v229 = vpop.permute.xlu0 %228
        %230 = vset.pattern.permute.xlu0 0
        %231 = vperm.xlu0 %230, %v198
        %v232 = vpop.permute.xlu0 %231
        %233 = vset.pattern.permute.xlu0 0
        %234 = vperm.xlu0 %233, %v199
        %v235 = vpop.permute.xlu0 %234
        %236 = vset.pattern.permute.xlu0 0
        %237 = vperm.xlu0 %236, %v200
        %v238 = vpop.permute.xlu0 %237
        %239 = vset.pattern.permute.xlu0 0
        %240 = vperm.xlu0 %239, %v201
        %v241 = vpop.permute.xlu0 %240
        %242 = vset.pattern.permute.xlu0 0
        %243 = vperm.xlu0 %242, %v202
        %v244 = vpop.permute.xlu0 %243
        %245 = vset.pattern.permute.xlu0 0
        %246 = vperm.xlu0 %245, %v203
        %v247 = vpop.permute.xlu0 %246
        %248 = vset.pattern.permute.xlu0 0
        %249 = vperm.xlu0 %248, %v204
        %v250 = vpop.permute.xlu0 %249
        %251 = vset.pattern.permute.xlu0 0
        %252 = vperm.xlu0 %251, %v205
        %v253 = vpop.permute.xlu0 %252
        %vm254 = vcmp.eq.s32.totalorder %v208, %v188
        %vm255 = vcmp.eq.s32.totalorder %v208, %v189
        %vm256 = vcmp.eq.s32.totalorder %v211, %v188
        %vm257 = vcmp.eq.s32.totalorder %v211, %v189
        %vm258 = vcmp.eq.s32.totalorder %v214, %v188
        %vm259 = vcmp.eq.s32.totalorder %v214, %v189
        %vm260 = vcmp.eq.s32.totalorder %v217, %v188
        %vm261 = vcmp.eq.s32.totalorder %v217, %v189
        %vm262 = vcmp.eq.s32.totalorder %v220, %v188
        %vm263 = vcmp.eq.s32.totalorder %v220, %v189
        %vm264 = vcmp.eq.s32.totalorder %v223, %v188
        %vm265 = vcmp.eq.s32.totalorder %v223, %v189
        %vm266 = vcmp.eq.s32.totalorder %v226, %v188
        %vm267 = vcmp.eq.s32.totalorder %v226, %v189
        %vm268 = vcmp.eq.s32.totalorder %v229, %v188
        %vm269 = vcmp.eq.s32.totalorder %v229, %v189
        %vm270 = vcmp.eq.s32.totalorder %v232, %v188
        %vm271 = vcmp.eq.s32.totalorder %v232, %v189
        %vm272 = vcmp.eq.s32.totalorder %v235, %v188
        %vm273 = vcmp.eq.s32.totalorder %v235, %v189
        %vm274 = vcmp.eq.s32.totalorder %v238, %v188
        %vm275 = vcmp.eq.s32.totalorder %v238, %v189
        %vm276 = vcmp.eq.s32.totalorder %v241, %v188
        %vm277 = vcmp.eq.s32.totalorder %v241, %v189
        %vm278 = vcmp.eq.s32.totalorder %v244, %v188
        %vm279 = vcmp.eq.s32.totalorder %v244, %v189
        %vm280 = vcmp.eq.s32.totalorder %v247, %v188
        %vm281 = vcmp.eq.s32.totalorder %v247, %v189
        %vm282 = vcmp.eq.s32.totalorder %v250, %v188
        %vm283 = vcmp.eq.s32.totalorder %v250, %v189
        %vm284 = vcmp.eq.s32.totalorder %v253, %v188
        %vm285 = vcmp.eq.s32.totalorder %v253, %v189
        %v286 = vsel %vm254, 1, 0
        %v287 = vsel %vm255, 1, 0
        %v288 = vsel %vm256, 1, 0
        %v289 = vsel %vm257, 1, 0
        %v290 = vsel %vm258, 1, 0
        %v291 = vsel %vm259, 1, 0
        %v292 = vsel %vm260, 1, 0
        %v293 = vsel %vm261, 1, 0
        %v294 = vsel %vm262, 1, 0
        %v295 = vsel %vm263, 1, 0
        %v296 = vsel %vm264, 1, 0
        %v297 = vsel %vm265, 1, 0
        %v298 = vsel %vm266, 1, 0
        %v299 = vsel %vm267, 1, 0
        %v300 = vsel %vm268, 1, 0
        %v301 = vsel %vm269, 1, 0
        %v302 = vsel %vm270, 1, 0
        %v303 = vsel %vm271, 1, 0
        %v304 = vsel %vm272, 1, 0
        %v305 = vsel %vm273, 1, 0
        %v306 = vsel %vm274, 1, 0
        %v307 = vsel %vm275, 1, 0
        %v308 = vsel %vm276, 1, 0
        %v309 = vsel %vm277, 1, 0
        %v310 = vsel %vm278, 1, 0
        %v311 = vsel %vm279, 1, 0
        %v312 = vsel %vm280, 1, 0
        %v313 = vsel %vm281, 1, 0
        %v314 = vsel %vm282, 1, 0
        %v315 = vsel %vm283, 1, 0
        %v316 = vsel %vm284, 1, 0
        %v317 = vsel %vm285, 1, 0
        %v318 = vcvt.s32.f32 %v286
        %v319 = vcvt.s32.f32 %v287
        %v320 = vcvt.s32.f32 %v288
        %v321 = vcvt.s32.f32 %v289
        %v322 = vcvt.s32.f32 %v290
        %v323 = vcvt.s32.f32 %v291
        %v324 = vcvt.s32.f32 %v292
        %v325 = vcvt.s32.f32 %v293
        %v326 = vcvt.s32.f32 %v294
        %v327 = vcvt.s32.f32 %v295
        %v328 = vcvt.s32.f32 %v296
        %v329 = vcvt.s32.f32 %v297
        %v330 = vcvt.s32.f32 %v298
        %v331 = vcvt.s32.f32 %v299
        %v332 = vcvt.s32.f32 %v300
        %v333 = vcvt.s32.f32 %v301
        %v334 = vcvt.s32.f32 %v302
        %v335 = vcvt.s32.f32 %v303
        %v336 = vcvt.s32.f32 %v304
        %v337 = vcvt.s32.f32 %v305
        %v338 = vcvt.s32.f32 %v306
        %v339 = vcvt.s32.f32 %v307
        %v340 = vcvt.s32.f32 %v308
        %v341 = vcvt.s32.f32 %v309
        %v342 = vcvt.s32.f32 %v310
        %v343 = vcvt.s32.f32 %v311
        %v344 = vcvt.s32.f32 %v312
        %v345 = vcvt.s32.f32 %v313
        %v346 = vcvt.s32.f32 %v314
        %v347 = vcvt.s32.f32 %v315
        %v348 = vcvt.s32.f32 %v316
        %v349 = vcvt.s32.f32 %v317
        %v350 = vld [vmem:[%s172] sm:$0xff]
        %v351 = vld [vmem:[%s172 + $0x20] sm:$0xff]
        %v352 = vld [vmem:[%s166 + $0x80] sm:$0xff]
        %v353 = vld [vmem:[%s166 + $0x88] sm:$0xff]
        %v354 = vld [vmem:[%s166 + $0x90] sm:$0xff]
        %v355 = vld [vmem:[%s166 + $0x98] sm:$0xff]
        %v356 = vld [vmem:[%s166 + $0xa0] sm:$0xff]
        %v357 = vld [vmem:[%s166 + $0xa8] sm:$0xff]
        %v358 = vld [vmem:[%s166 + $0xb0] sm:$0xff]
        %v359 = vld [vmem:[%s166 + $0xb8] sm:$0xff]
        %v360 = vld [vmem:[%s166 + $0xc0] sm:$0xff]
        %v361 = vld [vmem:[%s166 + $0xc8] sm:$0xff]
        %v362 = vld [vmem:[%s166 + $0xd0] sm:$0xff]
        %v363 = vld [vmem:[%s166 + $0xd8] sm:$0xff]
        %v364 = vld [vmem:[%s166 + $0xe0] sm:$0xff]
        %v365 = vld [vmem:[%s166 + $0xe8] sm:$0xff]
        %v366 = vld [vmem:[%s166 + $0xf0] sm:$0xff]
        %v367 = vld [vmem:[%s166 + $0xf8] sm:$0xff]
        %368 = vset.pattern.permute.xlu0 0
        %369 = vperm.xlu0 %368, %v352
        %v370 = vpop.permute.xlu0 %369
        %371 = vset.pattern.permute.xlu0 0
        %372 = vperm.xlu0 %371, %v353
        %v373 = vpop.permute.xlu0 %372
        %374 = vset.pattern.permute.xlu0 0
        %375 = vperm.xlu0 %374, %v354
        %v376 = vpop.permute.xlu0 %375
        %377 = vset.pattern.permute.xlu0 0
        %378 = vperm.xlu0 %377, %v355
        %v379 = vpop.permute.xlu0 %378
        %380 = vset.pattern.permute.xlu0 0
        %381 = vperm.xlu0 %380, %v356
        %v382 = vpop.permute.xlu0 %381
        %383 = vset.pattern.permute.xlu0 0
        %384 = vperm.xlu0 %383, %v357
        %v385 = vpop.permute.xlu0 %384
        %386 = vset.pattern.permute.xlu0 0
        %387 = vperm.xlu0 %386, %v358
        %v388 = vpop.permute.xlu0 %387
        %389 = vset.pattern.permute.xlu0 0
        %390 = vperm.xlu0 %389, %v359
        %v391 = vpop.permute.xlu0 %390
        %392 = vset.pattern.permute.xlu0 0
        %393 = vperm.xlu0 %392, %v360
        %v394 = vpop.permute.xlu0 %393
        %395 = vset.pattern.permute.xlu0 0
        %396 = vperm.xlu0 %395, %v361
        %v397 = vpop.permute.xlu0 %396
        %398 = vset.pattern.permute.xlu0 0
        %399 = vperm.xlu0 %398, %v362
        %v400 = vpop.permute.xlu0 %399
        %401 = vset.pattern.permute.xlu0 0
        %402 = vperm.xlu0 %401, %v363
        %v403 = vpop.permute.xlu0 %402
        %404 = vset.pattern.permute.xlu0 0
        %405 = vperm.xlu0 %404, %v364
        %v406 = vpop.permute.xlu0 %405
        %407 = vset.pattern.permute.xlu0 0
        %408 = vperm.xlu0 %407, %v365
        %v409 = vpop.permute.xlu0 %408
        %410 = vset.pattern.permute.xlu0 0
        %411 = vperm.xlu0 %410, %v366
        %v412 = vpop.permute.xlu0 %411
        %413 = vset.pattern.permute.xlu0 0
        %414 = vperm.xlu0 %413, %v367
        %v415 = vpop.permute.xlu0 %414
        %vm416 = vcmp.eq.s32.totalorder %v370, %v188
        %vm417 = vcmp.eq.s32.totalorder %v370, %v189
        %vm418 = vcmp.eq.s32.totalorder %v373, %v188
        %vm419 = vcmp.eq.s32.totalorder %v373, %v189
        %vm420 = vcmp.eq.s32.totalorder %v376, %v188
        %vm421 = vcmp.eq.s32.totalorder %v376, %v189
        %vm422 = vcmp.eq.s32.totalorder %v379, %v188
        %vm423 = vcmp.eq.s32.totalorder %v379, %v189
        %vm424 = vcmp.eq.s32.totalorder %v382, %v188
        %vm425 = vcmp.eq.s32.totalorder %v382, %v189
        %vm426 = vcmp.eq.s32.totalorder %v385, %v188
        %vm427 = vcmp.eq.s32.totalorder %v385, %v189
        %vm428 = vcmp.eq.s32.totalorder %v388, %v188
        %vm429 = vcmp.eq.s32.totalorder %v388, %v189
        %vm430 = vcmp.eq.s32.totalorder %v391, %v188
        %vm431 = vcmp.eq.s32.totalorder %v391, %v189
        %vm432 = vcmp.eq.s32.totalorder %v394, %v188
        %vm433 = vcmp.eq.s32.totalorder %v394, %v189
        %vm434 = vcmp.eq.s32.totalorder %v397, %v188
        %vm435 = vcmp.eq.s32.totalorder %v397, %v189
        %vm436 = vcmp.eq.s32.totalorder %v400, %v188
        %vm437 = vcmp.eq.s32.totalorder %v400, %v189
        %vm438 = vcmp.eq.s32.totalorder %v403, %v188
        %vm439 = vcmp.eq.s32.totalorder %v403, %v189
        %vm440 = vcmp.eq.s32.totalorder %v406, %v188
        %vm441 = vcmp.eq.s32.totalorder %v406, %v189
        %vm442 = vcmp.eq.s32.totalorder %v409, %v188
        %vm443 = vcmp.eq.s32.totalorder %v409, %v189
        %vm444 = vcmp.eq.s32.totalorder %v412, %v188
        %vm445 = vcmp.eq.s32.totalorder %v412, %v189
        %vm446 = vcmp.eq.s32.totalorder %v415, %v188
        %vm447 = vcmp.eq.s32.totalorder %v415, %v189
        %v448 = vsel %vm416, 1, 0
        %v449 = vsel %vm417, 1, 0
        %v450 = vsel %vm418, 1, 0
        %v451 = vsel %vm419, 1, 0
        %v452 = vsel %vm420, 1, 0
        %v453 = vsel %vm421, 1, 0
        %v454 = vsel %vm422, 1, 0
        %v455 = vsel %vm423, 1, 0
        %v456 = vsel %vm424, 1, 0
        %v457 = vsel %vm425, 1, 0
        %v458 = vsel %vm426, 1, 0
        %v459 = vsel %vm427, 1, 0
        %v460 = vsel %vm428, 1, 0
        %v461 = vsel %vm429, 1, 0
        %v462 = vsel %vm430, 1, 0
        %v463 = vsel %vm431, 1, 0
        %v464 = vsel %vm432, 1, 0
        %v465 = vsel %vm433, 1, 0
        %v466 = vsel %vm434, 1, 0
        %v467 = vsel %vm435, 1, 0
        %v468 = vsel %vm436, 1, 0
        %v469 = vsel %vm437, 1, 0
        %v470 = vsel %vm438, 1, 0
        %v471 = vsel %vm439, 1, 0
        %v472 = vsel %vm440, 1, 0
        %v473 = vsel %vm441, 1, 0
        %v474 = vsel %vm442, 1, 0
        %v475 = vsel %vm443, 1, 0
        %v476 = vsel %vm444, 1, 0
        %v477 = vsel %vm445, 1, 0
        %v478 = vsel %vm446, 1, 0
        %v479 = vsel %vm447, 1, 0
        %v480 = vcvt.s32.f32 %v448
        %v481 = vcvt.s32.f32 %v449
        %v482 = vcvt.s32.f32 %v450
        %v483 = vcvt.s32.f32 %v451
        %v484 = vcvt.s32.f32 %v452
        %v485 = vcvt.s32.f32 %v453
        %v486 = vcvt.s32.f32 %v454
        %v487 = vcvt.s32.f32 %v455
        %v488 = vcvt.s32.f32 %v456
        %v489 = vcvt.s32.f32 %v457
        %v490 = vcvt.s32.f32 %v458
        %v491 = vcvt.s32.f32 %v459
        %v492 = vcvt.s32.f32 %v460
        %v493 = vcvt.s32.f32 %v461
        %v494 = vcvt.s32.f32 %v462
        %v495 = vcvt.s32.f32 %v463
        %v496 = vcvt.s32.f32 %v464
        %v497 = vcvt.s32.f32 %v465
        %v498 = vcvt.s32.f32 %v466
        %v499 = vcvt.s32.f32 %v467
        %v500 = vcvt.s32.f32 %v468
        %v501 = vcvt.s32.f32 %v469
        %v502 = vcvt.s32.f32 %v470
        %v503 = vcvt.s32.f32 %v471
        %v504 = vcvt.s32.f32 %v472
        %v505 = vcvt.s32.f32 %v473
        %v506 = vcvt.s32.f32 %v474
        %v507 = vcvt.s32.f32 %v475
        %v508 = vcvt.s32.f32 %v476
        %v509 = vcvt.s32.f32 %v477
        %v510 = vcvt.s32.f32 %v478
        %v511 = vcvt.s32.f32 %v479
        %v512 = vld [vmem:[%s172 + $0x8] sm:$0xff]
        %v513 = vld [vmem:[%s172 + $0x28] sm:$0xff]
        %514 = vmatprep.subr.mxu0 %v511
        %515 = vmatpush1.msra.mxu0 %v510
        %516 = vmatprep.subr.mxu0 %v509
        %517 = vmatpush1.msra.mxu0 %v508
        %518 = vmatprep.subr.mxu0 %v507
        %519 = vmatpush1.msra.mxu0 %v506
        %520 = vmatprep.subr.mxu0 %v505
        %521 = vmatpush1.msra.mxu0 %v504
        %522 = vmatprep.subr.mxu0 %v503
        %523 = vmatpush1.msra.mxu0 %v502
        %524 = vmatprep.subr.mxu0 %v501
        %525 = vmatpush1.msra.mxu0 %v500
        %526 = vmatprep.subr.mxu0 %v499
        %527 = vmatpush1.msra.mxu0 %v498
        %528 = vmatprep.subr.mxu0 %v497
        %529 = vmatpush1.msra.mxu0 %v496
        %530 = vmatprep.subr.mxu0 %v495
        %531 = vmatpush1.msra.mxu0 %v494
        %532 = vmatprep.subr.mxu0 %v493
        %533 = vmatpush1.msra.mxu0 %v492
        %534 = vmatprep.subr.mxu0 %v491
        %535 = vmatpush1.msra.mxu0 %v490
        %536 = vmatprep.subr.mxu0 %v489
        %537 = vmatpush1.msra.mxu0 %v488
        %538 = vmatprep.subr.mxu0 %v487
        %539 = vmatpush1.msra.mxu0 %v486
        %540 = vmatprep.subr.mxu0 %v485
        %541 = vmatpush1.msra.mxu0 %v484
        %542 = vmatprep.subr.mxu0 %v483
        %543 = vmatpush1.msra.mxu0 %v482
        %544 = vmatprep.subr.mxu0 %v481
        %545 = vmatpush1.msra.mxu0 %v480
        %546 = vmatprep.subr.mxu0 0.0
        %547 = vmatpush2.msra.mxu0 0.0
        %548 = vmatprep.subr.mxu0 0.0
        %549 = vmatpush2.msra.mxu0 0.0
        %550 = vmatprep.subr.mxu0 0.0
        %551 = vmatpush2.msra.mxu0 0.0
        %552 = vmatprep.subr.mxu0 0.0
        %553 = vmatpush2.msra.mxu0 0.0
        %554 = vmatprep.subr.mxu0 0.0
        %555 = vmatpush2.msra.mxu0 0.0
        %556 = vmatprep.subr.mxu0 0.0
        %557 = vmatpush2.msra.mxu0 0.0
        %558 = vmatprep.subr.mxu0 0.0
        %559 = vmatpush2.msra.mxu0 0.0
        %560 = vmatprep.subr.mxu0 0.0
        %561 = vmatpush2.msra.mxu0 0.0
        %562 = vmatprep.subr.mxu0 0.0
        %563 = vmatpush2.msra.mxu0 0.0
        %564 = vmatprep.subr.mxu0 0.0
        %565 = vmatpush2.msra.mxu0 0.0
        %566 = vmatprep.subr.mxu0 0.0
        %567 = vmatpush2.msra.mxu0 0.0
        %568 = vmatprep.subr.mxu0 0.0
        %569 = vmatpush2.msra.mxu0 0.0
        %570 = vmatprep.subr.mxu0 0.0
        %571 = vmatpush2.msra.mxu0 0.0
        %572 = vmatprep.subr.mxu0 0.0
        %573 = vmatpush2.msra.mxu0 0.0
        %574 = vmatprep.subr.mxu0 0.0
        %575 = vmatpush2.msra.mxu0 0.0
        %576 = vmatprep.subr.mxu0 0.0
        %577 = vmatpush2.msra.mxu0 0.0
        %578 = vmatprep.mubr.f32.mxu0 0.0
        %579 = vmatmul.mubr.f32.gmra.mxu0 %v512
        %v580 = vpop.f32.mrf.mxu0
        %v581 = vadd.f32 0.0, %v580
        %v582 = vpop.f32.mrf.mxu0
        %v583 = vadd.f32 0.0, %v582
        %584 = vmatprep.mubr.f32.mxu0 0.0
        %585 = vmatmul.mubr.f32.gmra.mxu0 %v513
        %v586 = vpop.f32.mrf.mxu0
        %v587 = vadd.f32 0.0, %v586
        %v588 = vpop.f32.mrf.mxu0
        %v589 = vadd.f32 0.0, %v588
        %590 = vdwg.mxu0
        %591 = vmatprep.subr.mxu0 %v349
        %592 = vmatpush1.msra.mxu0 %v348
        %593 = vmatprep.subr.mxu0 %v347
        %594 = vmatpush1.msra.mxu0 %v346
        %595 = vmatprep.subr.mxu0 %v345
        %596 = vmatpush1.msra.mxu0 %v344
        %597 = vmatprep.subr.mxu0 %v343
        %598 = vmatpush1.msra.mxu0 %v342
        %599 = vmatprep.subr.mxu0 %v341
        %600 = vmatpush1.msra.mxu0 %v340
        %601 = vmatprep.subr.mxu0 %v339
        %602 = vmatpush1.msra.mxu0 %v338
        %603 = vmatprep.subr.mxu0 %v337
        %604 = vmatpush1.msra.mxu0 %v336
        %605 = vmatprep.subr.mxu0 %v335
        %606 = vmatpush1.msra.mxu0 %v334
        %607 = vmatprep.subr.mxu0 %v333
        %608 = vmatpush1.msra.mxu0 %v332
        %609 = vmatprep.subr.mxu0 %v331
        %610 = vmatpush1.msra.mxu0 %v330
        %611 = vmatprep.subr.mxu0 %v329
        %612 = vmatpush1.msra.mxu0 %v328
        %613 = vmatprep.subr.mxu0 %v327
        %614 = vmatpush1.msra.mxu0 %v326
        %615 = vmatprep.subr.mxu0 %v325
        %616 = vmatpush1.msra.mxu0 %v324
        %617 = vmatprep.subr.mxu0 %v323
        %618 = vmatpush1.msra.mxu0 %v322
        %619 = vmatprep.subr.mxu0 %v321
        %620 = vmatpush1.msra.mxu0 %v320
        %621 = vmatprep.subr.mxu0 %v319
        %622 = vmatpush1.msra.mxu0 %v318
        %623 = vmatprep.subr.mxu0 0.0
        %624 = vmatpush2.msra.mxu0 0.0
        %625 = vmatprep.subr.mxu0 0.0
        %626 = vmatpush2.msra.mxu0 0.0
        %627 = vmatprep.subr.mxu0 0.0
        %628 = vmatpush2.msra.mxu0 0.0
        %629 = vmatprep.subr.mxu0 0.0
        %630 = vmatpush2.msra.mxu0 0.0
        %631 = vmatprep.subr.mxu0 0.0
        %632 = vmatpush2.msra.mxu0 0.0
        %633 = vmatprep.subr.mxu0 0.0
        %634 = vmatpush2.msra.mxu0 0.0
        %635 = vmatprep.subr.mxu0 0.0
        %636 = vmatpush2.msra.mxu0 0.0
        %637 = vmatprep.subr.mxu0 0.0
        %638 = vmatpush2.msra.mxu0 0.0
        %639 = vmatprep.subr.mxu0 0.0
        %640 = vmatpush2.msra.mxu0 0.0
        %641 = vmatprep.subr.mxu0 0.0
        %642 = vmatpush2.msra.mxu0 0.0
        %643 = vmatprep.subr.mxu0 0.0
        %644 = vmatpush2.msra.mxu0 0.0
        %645 = vmatprep.subr.mxu0 0.0
        %646 = vmatpush2.msra.mxu0 0.0
        %647 = vmatprep.subr.mxu0 0.0
        %648 = vmatpush2.msra.mxu0 0.0
        %649 = vmatprep.subr.mxu0 0.0
        %650 = vmatpush2.msra.mxu0 0.0
        %651 = vmatprep.subr.mxu0 0.0
        %652 = vmatpush2.msra.mxu0 0.0
        %653 = vmatprep.subr.mxu0 0.0
        %654 = vmatpush2.msra.mxu0 0.0
        %655 = vmatprep.mubr.f32.mxu0 0.0
        %656 = vmatmul.mubr.f32.gmra.mxu0 %v350
        %v657 = vpop.f32.mrf.mxu0
        %v658 = vadd.f32 %v581, %v657
        %v659 = vpop.f32.mrf.mxu0
        %v660 = vadd.f32 %v583, %v659
        %661 = vmatprep.mubr.f32.mxu0 0.0
        %662 = vmatmul.mubr.f32.gmra.mxu0 %v351
        %v663 = vpop.f32.mrf.mxu0
        %v664 = vadd.f32 %v587, %v663
        %v665 = vpop.f32.mrf.mxu0
        %v666 = vadd.f32 %v589, %v665
        %667 = vdwg.mxu0
        %v668 = vld [vmem:[%s166 + $0x100] sm:$0xff]
        %v669 = vld [vmem:[%s166 + $0x108] sm:$0xff]
        %v670 = vld [vmem:[%s166 + $0x110] sm:$0xff]
        %v671 = vld [vmem:[%s166 + $0x118] sm:$0xff]
        %v672 = vld [vmem:[%s166 + $0x120] sm:$0xff]
        %v673 = vld [vmem:[%s166 + $0x128] sm:$0xff]
        %v674 = vld [vmem:[%s166 + $0x130] sm:$0xff]
        %v675 = vld [vmem:[%s166 + $0x138] sm:$0xff]
        %v676 = vld [vmem:[%s166 + $0x140] sm:$0xff]
        %v677 = vld [vmem:[%s166 + $0x148] sm:$0xff]
        %v678 = vld [vmem:[%s166 + $0x150] sm:$0xff]
        %v679 = vld [vmem:[%s166 + $0x158] sm:$0xff]
        %v680 = vld [vmem:[%s166 + $0x160] sm:$0xff]
        %v681 = vld [vmem:[%s166 + $0x168] sm:$0xff]
        %v682 = vld [vmem:[%s166 + $0x170] sm:$0xff]
        %v683 = vld [vmem:[%s166 + $0x178] sm:$0xff]
        %684 = vset.pattern.permute.xlu0 0
        %685 = vperm.xlu0 %684, %v668
        %v686 = vpop.permute.xlu0 %685
        %687 = vset.pattern.permute.xlu0 0
        %688 = vperm.xlu0 %687, %v669
        %v689 = vpop.permute.xlu0 %688
        %690 = vset.pattern.permute.xlu0 0
        %691 = vperm.xlu0 %690, %v670
        %v692 = vpop.permute.xlu0 %691
        %693 = vset.pattern.permute.xlu0 0
        %694 = vperm.xlu0 %693, %v671
        %v695 = vpop.permute.xlu0 %694
        %696 = vset.pattern.permute.xlu0 0
        %697 = vperm.xlu0 %696, %v672
        %v698 = vpop.permute.xlu0 %697
        %699 = vset.pattern.permute.xlu0 0
        %700 = vperm.xlu0 %699, %v673
        %v701 = vpop.permute.xlu0 %700
        %702 = vset.pattern.permute.xlu0 0
        %703 = vperm.xlu0 %702, %v674
        %v704 = vpop.permute.xlu0 %703
        %705 = vset.pattern.permute.xlu0 0
        %706 = vperm.xlu0 %705, %v675
        %v707 = vpop.permute.xlu0 %706
        %708 = vset.pattern.permute.xlu0 0
        %709 = vperm.xlu0 %708, %v676
        %v710 = vpop.permute.xlu0 %709
        %711 = vset.pattern.permute.xlu0 0
        %712 = vperm.xlu0 %711, %v677
        %v713 = vpop.permute.xlu0 %712
        %714 = vset.pattern.permute.xlu0 0
        %715 = vperm.xlu0 %714, %v678
        %v716 = vpop.permute.xlu0 %715
        %717 = vset.pattern.permute.xlu0 0
        %718 = vperm.xlu0 %717, %v679
        %v719 = vpop.permute.xlu0 %718
        %720 = vset.pattern.permute.xlu0 0
        %721 = vperm.xlu0 %720, %v680
        %v722 = vpop.permute.xlu0 %721
        %723 = vset.pattern.permute.xlu0 0
        %724 = vperm.xlu0 %723, %v681
        %v725 = vpop.permute.xlu0 %724
        %726 = vset.pattern.permute.xlu0 0
        %727 = vperm.xlu0 %726, %v682
        %v728 = vpop.permute.xlu0 %727
        %729 = vset.pattern.permute.xlu0 0
        %730 = vperm.xlu0 %729, %v683
        %v731 = vpop.permute.xlu0 %730
        %vm732 = vcmp.eq.s32.totalorder %v686, %v188
        %vm733 = vcmp.eq.s32.totalorder %v686, %v189
        %vm734 = vcmp.eq.s32.totalorder %v689, %v188
        %vm735 = vcmp.eq.s32.totalorder %v689, %v189
        %vm736 = vcmp.eq.s32.totalorder %v692, %v188
        %vm737 = vcmp.eq.s32.totalorder %v692, %v189
        %vm738 = vcmp.eq.s32.totalorder %v695, %v188
        %vm739 = vcmp.eq.s32.totalorder %v695, %v189
        %vm740 = vcmp.eq.s32.totalorder %v698, %v188
        %vm741 = vcmp.eq.s32.totalorder %v698, %v189
        %vm742 = vcmp.eq.s32.totalorder %v701, %v188
        %vm743 = vcmp.eq.s32.totalorder %v701, %v189
        %vm744 = vcmp.eq.s32.totalorder %v704, %v188
        %vm745 = vcmp.eq.s32.totalorder %v704, %v189
        %vm746 = vcmp.eq.s32.totalorder %v707, %v188
        %vm747 = vcmp.eq.s32.totalorder %v707, %v189
        %vm748 = vcmp.eq.s32.totalorder %v710, %v188
        %vm749 = vcmp.eq.s32.totalorder %v710, %v189
        %vm750 = vcmp.eq.s32.totalorder %v713, %v188
        %vm751 = vcmp.eq.s32.totalorder %v713, %v189
        %vm752 = vcmp.eq.s32.totalorder %v716, %v188
        %vm753 = vcmp.eq.s32.totalorder %v716, %v189
        %vm754 = vcmp.eq.s32.totalorder %v719, %v188
        %vm755 = vcmp.eq.s32.totalorder %v719, %v189
        %vm756 = vcmp.eq.s32.totalorder %v722, %v188
        %vm757 = vcmp.eq.s32.totalorder %v722, %v189
        %vm758 = vcmp.eq.s32.totalorder %v725, %v188
        %vm759 = vcmp.eq.s32.totalorder %v725, %v189
        %vm760 = vcmp.eq.s32.totalorder %v728, %v188
        %vm761 = vcmp.eq.s32.totalorder %v728, %v189
        %vm762 = vcmp.eq.s32.totalorder %v731, %v188
        %vm763 = vcmp.eq.s32.totalorder %v731, %v189
        %v764 = vsel %vm732, 1, 0
        %v765 = vsel %vm733, 1, 0
        %v766 = vsel %vm734, 1, 0
        %v767 = vsel %vm735, 1, 0
        %v768 = vsel %vm736, 1, 0
        %v769 = vsel %vm737, 1, 0
        %v770 = vsel %vm738, 1, 0
        %v771 = vsel %vm739, 1, 0
        %v772 = vsel %vm740, 1, 0
        %v773 = vsel %vm741, 1, 0
        %v774 = vsel %vm742, 1, 0
        %v775 = vsel %vm743, 1, 0
        %v776 = vsel %vm744, 1, 0
        %v777 = vsel %vm745, 1, 0
        %v778 = vsel %vm746, 1, 0
        %v779 = vsel %vm747, 1, 0
        %v780 = vsel %vm748, 1, 0
        %v781 = vsel %vm749, 1, 0
        %v782 = vsel %vm750, 1, 0
        %v783 = vsel %vm751, 1, 0
        %v784 = vsel %vm752, 1, 0
        %v785 = vsel %vm753, 1, 0
        %v786 = vsel %vm754, 1, 0
        %v787 = vsel %vm755, 1, 0
        %v788 = vsel %vm756, 1, 0
        %v789 = vsel %vm757, 1, 0
        %v790 = vsel %vm758, 1, 0
        %v791 = vsel %vm759, 1, 0
        %v792 = vsel %vm760, 1, 0
        %v793 = vsel %vm761, 1, 0
        %v794 = vsel %vm762, 1, 0
        %v795 = vsel %vm763, 1, 0
        %v796 = vcvt.s32.f32 %v764
        %v797 = vcvt.s32.f32 %v765
        %v798 = vcvt.s32.f32 %v766
        %v799 = vcvt.s32.f32 %v767
        %v800 = vcvt.s32.f32 %v768
        %v801 = vcvt.s32.f32 %v769
        %v802 = vcvt.s32.f32 %v770
        %v803 = vcvt.s32.f32 %v771
        %v804 = vcvt.s32.f32 %v772
        %v805 = vcvt.s32.f32 %v773
        %v806 = vcvt.s32.f32 %v774
        %v807 = vcvt.s32.f32 %v775
        %v808 = vcvt.s32.f32 %v776
        %v809 = vcvt.s32.f32 %v777
        %v810 = vcvt.s32.f32 %v778
        %v811 = vcvt.s32.f32 %v779
        %v812 = vcvt.s32.f32 %v780
        %v813 = vcvt.s32.f32 %v781
        %v814 = vcvt.s32.f32 %v782
        %v815 = vcvt.s32.f32 %v783
        %v816 = vcvt.s32.f32 %v784
        %v817 = vcvt.s32.f32 %v785
        %v818 = vcvt.s32.f32 %v786
        %v819 = vcvt.s32.f32 %v787
        %v820 = vcvt.s32.f32 %v788
        %v821 = vcvt.s32.f32 %v789
        %v822 = vcvt.s32.f32 %v790
        %v823 = vcvt.s32.f32 %v791
        %v824 = vcvt.s32.f32 %v792
        %v825 = vcvt.s32.f32 %v793
        %v826 = vcvt.s32.f32 %v794
        %v827 = vcvt.s32.f32 %v795
        %v828 = vld [vmem:[%s172 + $0x10] sm:$0xff]
        %v829 = vld [vmem:[%s172 + $0x30] sm:$0xff]
        %830 = vmatprep.subr.mxu0 %v827
        %831 = vmatpush1.msra.mxu0 %v826
        %832 = vmatprep.subr.mxu0 %v825
        %833 = vmatpush1.msra.mxu0 %v824
        %834 = vmatprep.subr.mxu0 %v823
        %835 = vmatpush1.msra.mxu0 %v822
        %836 = vmatprep.subr.mxu0 %v821
        %837 = vmatpush1.msra.mxu0 %v820
        %838 = vmatprep.subr.mxu0 %v819
        %839 = vmatpush1.msra.mxu0 %v818
        %840 = vmatprep.subr.mxu0 %v817
        %841 = vmatpush1.msra.mxu0 %v816
        %842 = vmatprep.subr.mxu0 %v815
        %843 = vmatpush1.msra.mxu0 %v814
        %844 = vmatprep.subr.mxu0 %v813
        %845 = vmatpush1.msra.mxu0 %v812
        %846 = vmatprep.subr.mxu0 %v811
        %847 = vmatpush1.msra.mxu0 %v810
        %848 = vmatprep.subr.mxu0 %v809
        %849 = vmatpush1.msra.mxu0 %v808
        %850 = vmatprep.subr.mxu0 %v807
        %851 = vmatpush1.msra.mxu0 %v806
        %852 = vmatprep.subr.mxu0 %v805
        %853 = vmatpush1.msra.mxu0 %v804
        %854 = vmatprep.subr.mxu0 %v803
        %855 = vmatpush1.msra.mxu0 %v802
        %856 = vmatprep.subr.mxu0 %v801
        %857 = vmatpush1.msra.mxu0 %v800
        %858 = vmatprep.subr.mxu0 %v799
        %859 = vmatpush1.msra.mxu0 %v798
        %860 = vmatprep.subr.mxu0 %v797
        %861 = vmatpush1.msra.mxu0 %v796
        %862 = vmatprep.subr.mxu0 0.0
        %863 = vmatpush2.msra.mxu0 0.0
        %864 = vmatprep.subr.mxu0 0.0
        %865 = vmatpush2.msra.mxu0 0.0
        %866 = vmatprep.subr.mxu0 0.0
        %867 = vmatpush2.msra.mxu0 0.0
        %868 = vmatprep.subr.mxu0 0.0
        %869 = vmatpush2.msra.mxu0 0.0
        %870 = vmatprep.subr.mxu0 0.0
        %871 = vmatpush2.msra.mxu0 0.0
        %872 = vmatprep.subr.mxu0 0.0
        %873 = vmatpush2.msra.mxu0 0.0
        %874 = vmatprep.subr.mxu0 0.0
        %875 = vmatpush2.msra.mxu0 0.0
        %876 = vmatprep.subr.mxu0 0.0
        %877 = vmatpush2.msra.mxu0 0.0
        %878 = vmatprep.subr.mxu0 0.0
        %879 = vmatpush2.msra.mxu0 0.0
        %880 = vmatprep.subr.mxu0 0.0
        %881 = vmatpush2.msra.mxu0 0.0
        %882 = vmatprep.subr.mxu0 0.0
        %883 = vmatpush2.msra.mxu0 0.0
        %884 = vmatprep.subr.mxu0 0.0
        %885 = vmatpush2.msra.mxu0 0.0
        %886 = vmatprep.subr.mxu0 0.0
        %887 = vmatpush2.msra.mxu0 0.0
        %888 = vmatprep.subr.mxu0 0.0
        %889 = vmatpush2.msra.mxu0 0.0
        %890 = vmatprep.subr.mxu0 0.0
        %891 = vmatpush2.msra.mxu0 0.0
        %892 = vmatprep.subr.mxu0 0.0
        %893 = vmatpush2.msra.mxu0 0.0
        %894 = vmatprep.mubr.f32.mxu0 0.0
        %895 = vmatmul.mubr.f32.gmra.mxu0 %v828
        %v896 = vpop.f32.mrf.mxu0
        %v897 = vadd.f32 0.0, %v896
        %v898 = vpop.f32.mrf.mxu0
        %v899 = vadd.f32 0.0, %v898
        %900 = vmatprep.mubr.f32.mxu0 0.0
        %901 = vmatmul.mubr.f32.gmra.mxu0 %v829
        %v902 = vpop.f32.mrf.mxu0
        %v903 = vadd.f32 0.0, %v902
        %v904 = vpop.f32.mrf.mxu0
        %v905 = vadd.f32 0.0, %v904
        %906 = vdwg.mxu0
        %v907 = vadd.f32 %v658, %v897
        %v908 = vadd.f32 %v660, %v899
        %v909 = vadd.f32 %v664, %v903
        %v910 = vadd.f32 %v666, %v905
        %v911 = vld [vmem:[%s166 + $0x180] sm:$0xff]
        %v912 = vld [vmem:[%s166 + $0x188] sm:$0xff]
        %v913 = vld [vmem:[%s166 + $0x190] sm:$0xff]
        %v914 = vld [vmem:[%s166 + $0x198] sm:$0xff]
        %v915 = vld [vmem:[%s166 + $0x1a0] sm:$0xff]
        %v916 = vld [vmem:[%s166 + $0x1a8] sm:$0xff]
        %v917 = vld [vmem:[%s166 + $0x1b0] sm:$0xff]
        %v918 = vld [vmem:[%s166 + $0x1b8] sm:$0xff]
        %v919 = vld [vmem:[%s166 + $0x1c0] sm:$0xff]
        %v920 = vld [vmem:[%s166 + $0x1c8] sm:$0xff]
        %v921 = vld [vmem:[%s166 + $0x1d0] sm:$0xff]
        %v922 = vld [vmem:[%s166 + $0x1d8] sm:$0xff]
        %v923 = vld [vmem:[%s166 + $0x1e0] sm:$0xff]
        %v924 = vld [vmem:[%s166 + $0x1e8] sm:$0xff]
        %v925 = vld [vmem:[%s166 + $0x1f0] sm:$0xff]
        %v926 = vld [vmem:[%s166 + $0x1f8] sm:$0xff]
        %927 = vset.pattern.permute.xlu0 0
        %928 = vperm.xlu0 %927, %v911
        %v929 = vpop.permute.xlu0 %928
        %930 = vset.pattern.permute.xlu0 0
        %931 = vperm.xlu0 %930, %v912
        %v932 = vpop.permute.xlu0 %931
        %933 = vset.pattern.permute.xlu0 0
        %934 = vperm.xlu0 %933, %v913
        %v935 = vpop.permute.xlu0 %934
        %936 = vset.pattern.permute.xlu0 0
        %937 = vperm.xlu0 %936, %v914
        %v938 = vpop.permute.xlu0 %937
        %939 = vset.pattern.permute.xlu0 0
        %940 = vperm.xlu0 %939, %v915
        %v941 = vpop.permute.xlu0 %940
        %942 = vset.pattern.permute.xlu0 0
        %943 = vperm.xlu0 %942, %v916
        %v944 = vpop.permute.xlu0 %943
        %945 = vset.pattern.permute.xlu0 0
        %946 = vperm.xlu0 %945, %v917
        %v947 = vpop.permute.xlu0 %946
        %948 = vset.pattern.permute.xlu0 0
        %949 = vperm.xlu0 %948, %v918
        %v950 = vpop.permute.xlu0 %949
        %951 = vset.pattern.permute.xlu0 0
        %952 = vperm.xlu0 %951, %v919
        %v953 = vpop.permute.xlu0 %952
        %954 = vset.pattern.permute.xlu0 0
        %955 = vperm.xlu0 %954, %v920
        %v956 = vpop.permute.xlu0 %955
        %957 = vset.pattern.permute.xlu0 0
        %958 = vperm.xlu0 %957, %v921
        %v959 = vpop.permute.xlu0 %958
        %960 = vset.pattern.permute.xlu0 0
        %961 = vperm.xlu0 %960, %v922
        %v962 = vpop.permute.xlu0 %961
        %963 = vset.pattern.permute.xlu0 0
        %964 = vperm.xlu0 %963, %v923
        %v965 = vpop.permute.xlu0 %964
        %966 = vset.pattern.permute.xlu0 0
        %967 = vperm.xlu0 %966, %v924
        %v968 = vpop.permute.xlu0 %967
        %969 = vset.pattern.permute.xlu0 0
        %970 = vperm.xlu0 %969, %v925
        %v971 = vpop.permute.xlu0 %970
        %972 = vset.pattern.permute.xlu0 0
        %973 = vperm.xlu0 %972, %v926
        %v974 = vpop.permute.xlu0 %973
        %vm975 = vcmp.eq.s32.totalorder %v929, %v188
        %vm976 = vcmp.eq.s32.totalorder %v929, %v189
        %vm977 = vcmp.eq.s32.totalorder %v932, %v188
        %vm978 = vcmp.eq.s32.totalorder %v932, %v189
        %vm979 = vcmp.eq.s32.totalorder %v935, %v188
        %vm980 = vcmp.eq.s32.totalorder %v935, %v189
        %vm981 = vcmp.eq.s32.totalorder %v938, %v188
        %vm982 = vcmp.eq.s32.totalorder %v938, %v189
        %vm983 = vcmp.eq.s32.totalorder %v941, %v188
        %vm984 = vcmp.eq.s32.totalorder %v941, %v189
        %vm985 = vcmp.eq.s32.totalorder %v944, %v188
        %vm986 = vcmp.eq.s32.totalorder %v944, %v189
        %vm987 = vcmp.eq.s32.totalorder %v947, %v188
        %vm988 = vcmp.eq.s32.totalorder %v947, %v189
        %vm989 = vcmp.eq.s32.totalorder %v950, %v188
        %vm990 = vcmp.eq.s32.totalorder %v950, %v189
        %vm991 = vcmp.eq.s32.totalorder %v953, %v188
        %vm992 = vcmp.eq.s32.totalorder %v953, %v189
        %vm993 = vcmp.eq.s32.totalorder %v956, %v188
        %vm994 = vcmp.eq.s32.totalorder %v956, %v189
        %vm995 = vcmp.eq.s32.totalorder %v959, %v188
        %vm996 = vcmp.eq.s32.totalorder %v959, %v189
        %vm997 = vcmp.eq.s32.totalorder %v962, %v188
        %vm998 = vcmp.eq.s32.totalorder %v962, %v189
        %vm999 = vcmp.eq.s32.totalorder %v965, %v188
        %vm1000 = vcmp.eq.s32.totalorder %v965, %v189
        %vm1001 = vcmp.eq.s32.totalorder %v968, %v188
        %vm1002 = vcmp.eq.s32.totalorder %v968, %v189
        %vm1003 = vcmp.eq.s32.totalorder %v971, %v188
        %vm1004 = vcmp.eq.s32.totalorder %v971, %v189
        %vm1005 = vcmp.eq.s32.totalorder %v974, %v188
        %vm1006 = vcmp.eq.s32.totalorder %v974, %v189
        %v1007 = vsel %vm975, 1, 0
        %v1008 = vsel %vm976, 1, 0
        %v1009 = vsel %vm977, 1, 0
        %v1010 = vsel %vm978, 1, 0
        %v1011 = vsel %vm979, 1, 0
        %v1012 = vsel %vm980, 1, 0
        %v1013 = vsel %vm981, 1, 0
        %v1014 = vsel %vm982, 1, 0
        %v1015 = vsel %vm983, 1, 0
        %v1016 = vsel %vm984, 1, 0
        %v1017 = vsel %vm985, 1, 0
        %v1018 = vsel %vm986, 1, 0
        %v1019 = vsel %vm987, 1, 0
        %v1020 = vsel %vm988, 1, 0
        %v1021 = vsel %vm989, 1, 0
        %v1022 = vsel %vm990, 1, 0
        %v1023 = vsel %vm991, 1, 0
        %v1024 = vsel %vm992, 1, 0
        %v1025 = vsel %vm993, 1, 0
        %v1026 = vsel %vm994, 1, 0
        %v1027 = vsel %vm995, 1, 0
        %v1028 = vsel %vm996, 1, 0
        %v1029 = vsel %vm997, 1, 0
        %v1030 = vsel %vm998, 1, 0
        %v1031 = vsel %vm999, 1, 0
        %v1032 = vsel %vm1000, 1, 0
        %v1033 = vsel %vm1001, 1, 0
        %v1034 = vsel %vm1002, 1, 0
        %v1035 = vsel %vm1003, 1, 0
        %v1036 = vsel %vm1004, 1, 0
        %v1037 = vsel %vm1005, 1, 0
        %v1038 = vsel %vm1006, 1, 0
        %v1039 = vcvt.s32.f32 %v1007
        %v1040 = vcvt.s32.f32 %v1008
        %v1041 = vcvt.s32.f32 %v1009
        %v1042 = vcvt.s32.f32 %v1010
        %v1043 = vcvt.s32.f32 %v1011
        %v1044 = vcvt.s32.f32 %v1012
        %v1045 = vcvt.s32.f32 %v1013
        %v1046 = vcvt.s32.f32 %v1014
        %v1047 = vcvt.s32.f32 %v1015
        %v1048 = vcvt.s32.f32 %v1016
        %v1049 = vcvt.s32.f32 %v1017
        %v1050 = vcvt.s32.f32 %v1018
        %v1051 = vcvt.s32.f32 %v1019
        %v1052 = vcvt.s32.f32 %v1020
        %v1053 = vcvt.s32.f32 %v1021
        %v1054 = vcvt.s32.f32 %v1022
        %v1055 = vcvt.s32.f32 %v1023
        %v1056 = vcvt.s32.f32 %v1024
        %v1057 = vcvt.s32.f32 %v1025
        %v1058 = vcvt.s32.f32 %v1026
        %v1059 = vcvt.s32.f32 %v1027
        %v1060 = vcvt.s32.f32 %v1028
        %v1061 = vcvt.s32.f32 %v1029
        %v1062 = vcvt.s32.f32 %v1030
        %v1063 = vcvt.s32.f32 %v1031
        %v1064 = vcvt.s32.f32 %v1032
        %v1065 = vcvt.s32.f32 %v1033
        %v1066 = vcvt.s32.f32 %v1034
        %v1067 = vcvt.s32.f32 %v1035
        %v1068 = vcvt.s32.f32 %v1036
        %v1069 = vcvt.s32.f32 %v1037
        %v1070 = vcvt.s32.f32 %v1038
        %v1071 = vld [vmem:[%s172 + $0x18] sm:$0xff]
        %v1072 = vld [vmem:[%s172 + $0x38] sm:$0xff]
        %1073 = vmatprep.subr.mxu0 %v1070
        %1074 = vmatpush1.msra.mxu0 %v1069
        %1075 = vmatprep.subr.mxu0 %v1068
        %1076 = vmatpush1.msra.mxu0 %v1067
        %1077 = vmatprep.subr.mxu0 %v1066
        %1078 = vmatpush1.msra.mxu0 %v1065
        %1079 = vmatprep.subr.mxu0 %v1064
        %1080 = vmatpush1.msra.mxu0 %v1063
        %1081 = vmatprep.subr.mxu0 %v1062
        %1082 = vmatpush1.msra.mxu0 %v1061
        %1083 = vmatprep.subr.mxu0 %v1060
        %1084 = vmatpush1.msra.mxu0 %v1059
        %1085 = vmatprep.subr.mxu0 %v1058
        %1086 = vmatpush1.msra.mxu0 %v1057
        %1087 = vmatprep.subr.mxu0 %v1056
        %1088 = vmatpush1.msra.mxu0 %v1055
        %1089 = vmatprep.subr.mxu0 %v1054
        %1090 = vmatpush1.msra.mxu0 %v1053
        %1091 = vmatprep.subr.mxu0 %v1052
        %1092 = vmatpush1.msra.mxu0 %v1051
        %1093 = vmatprep.subr.mxu0 %v1050
        %1094 = vmatpush1.msra.mxu0 %v1049
        %1095 = vmatprep.subr.mxu0 %v1048
        %1096 = vmatpush1.msra.mxu0 %v1047
        %1097 = vmatprep.subr.mxu0 %v1046
        %1098 = vmatpush1.msra.mxu0 %v1045
        %1099 = vmatprep.subr.mxu0 %v1044
        %1100 = vmatpush1.msra.mxu0 %v1043
        %1101 = vmatprep.subr.mxu0 %v1042
        %1102 = vmatpush1.msra.mxu0 %v1041
        %1103 = vmatprep.subr.mxu0 %v1040
        %1104 = vmatpush1.msra.mxu0 %v1039
        %1105 = vmatprep.subr.mxu0 0.0
        %1106 = vmatpush2.msra.mxu0 0.0
        %1107 = vmatprep.subr.mxu0 0.0
        %1108 = vmatpush2.msra.mxu0 0.0
        %1109 = vmatprep.subr.mxu0 0.0
        %1110 = vmatpush2.msra.mxu0 0.0
        %1111 = vmatprep.subr.mxu0 0.0
        %1112 = vmatpush2.msra.mxu0 0.0
        %1113 = vmatprep.subr.mxu0 0.0
        %1114 = vmatpush2.msra.mxu0 0.0
        %1115 = vmatprep.subr.mxu0 0.0
        %1116 = vmatpush2.msra.mxu0 0.0
        %1117 = vmatprep.subr.mxu0 0.0
        %1118 = vmatpush2.msra.mxu0 0.0
        %1119 = vmatprep.subr.mxu0 0.0
        %1120 = vmatpush2.msra.mxu0 0.0
        %1121 = vmatprep.subr.mxu0 0.0
        %1122 = vmatpush2.msra.mxu0 0.0
        %1123 = vmatprep.subr.mxu0 0.0
        %1124 = vmatpush2.msra.mxu0 0.0
        %1125 = vmatprep.subr.mxu0 0.0
        %1126 = vmatpush2.msra.mxu0 0.0
        %1127 = vmatprep.subr.mxu0 0.0
        %1128 = vmatpush2.msra.mxu0 0.0
        %1129 = vmatprep.subr.mxu0 0.0
        %1130 = vmatpush2.msra.mxu0 0.0
        %1131 = vmatprep.subr.mxu0 0.0
        %1132 = vmatpush2.msra.mxu0 0.0
        %1133 = vmatprep.subr.mxu0 0.0
        %1134 = vmatpush2.msra.mxu0 0.0
        %1135 = vmatprep.subr.mxu0 0.0
        %1136 = vmatpush2.msra.mxu0 0.0
        %1137 = vmatprep.mubr.f32.mxu0 0.0
        %1138 = vmatmul.mubr.f32.gmra.mxu0 %v1071
        %v1139 = vpop.f32.mrf.mxu0
        %v1140 = vadd.f32 0.0, %v1139
        %v1141 = vpop.f32.mrf.mxu0
        %v1142 = vadd.f32 0.0, %v1141
        %1143 = vmatprep.mubr.f32.mxu0 0.0
        %1144 = vmatmul.mubr.f32.gmra.mxu0 %v1072
        %v1145 = vpop.f32.mrf.mxu0
        %v1146 = vadd.f32 0.0, %v1145
        %v1147 = vpop.f32.mrf.mxu0
        %v1148 = vadd.f32 0.0, %v1147
        %1149 = vdwg.mxu0
        %v1150 = vadd.f32 %v907, %v1140
        %v1151 = vadd.f32 %v908, %v1142
        %v1152 = vadd.f32 %v909, %v1146
        %v1153 = vadd.f32 %v910, %v1148
        %v1154 = vld [vmem:[%s161] sm:$0xff]
        %v1155 = vld [vmem:[%s161 + $0x8] sm:$0xff]
        %v1156 = vld [vmem:[%s161 + $0x10] sm:$0xff]
        %v1157 = vld [vmem:[%s161 + $0x18] sm:$0xff]
        %v1158 = vadd.f32 %v1154, %v1150
        %v1159 = vadd.f32 %v1155, %v1151
        %v1160 = vadd.f32 %v1156, %v1152
        %v1161 = vadd.f32 %v1157, %v1153
        %1162 = vst [vmem:[%s161] sm:$0xff] %v1158
        %1163 = vst [vmem:[%s161 + $0x8] sm:$0xff] %v1159
        %1164 = vst [vmem:[%s161 + $0x10] sm:$0xff] %v1160
        %1165 = vst [vmem:[%s161 + $0x18] sm:$0xff] %v1161
        %s1166 = sand.u32 %s85, 1
        %s1167 = sand.u32 %s85, 1
        %s1168 = smul.addr %s1167, 32
        %s1169 = scalar_lea.vmem [#allocation2], %s1168
        // Predicated region
        $region33: #{_lambda_.3} parent=27 // pred_check
          %p1170 = pneg %p95
        $region34: #{_lambda_.3} parent=27 // pred_check_branch
          %1172 = sbr.rel (%p1170) target = $region36
        $region35: #{_lambda_.3} parent=27 // pred_region
          %s1173 = smul.u32 2, %s17
          %s1174 = smul.addr %s1173, 8
          %s1175 = scalar_lea.vmem %s2, %s1174
          // Predicated region
          $region37: #{_lambda_.3} parent=35 // pred_check
            _
          $region38: #{_lambda_.3} parent=35 // pred_check_branch
            %1177 = sbr.rel (0) target = $region40
          $region39: #{_lambda_.3} parent=35 // pred_region
            // Predicated region
            $region41: #{_lambda_.3} parent=39 // pred_check
              _
            $region42: #{_lambda_.3} parent=39 // pred_check_branch
              %1179 = sbr.rel (0) target = $region44
            $region43: #{_lambda_.3} parent=39 // pred_region
              loop: start=0, step=1, limit=1
              $region45: #{_lambda_.3} parent=43 // loop_pre_header
                _
              $region46: #{_lambda_.3} parent=43 // loop_header
                %s1181 = sphi 0, %s1185
                %p1182 = scmp.ge.s32.totalorder %s1181, 1
                %s1186 = sphi %s1169, %s1169
                %s1187 = sphi %s1175, %s1175
              $region47: #{_lambda_.3} parent=43 // loop_header_branch
                %1184 = sbr.rel (%p1182) target = $region51
              $region48: #{_lambda_.3} parent=43 // loop_body
                %v1188 = vld [vmem:[%s1186] sm:$0xff]
                %1189 = vst [vmem:[%s1187] sm:$0xff] %v1188
                %v1190 = vld [vmem:[%s1186 + $0x8] sm:$0xff]
                %1191 = vst [vmem:[%s1187 + $0x8] sm:$0xff] %v1190
                %v1192 = vld [vmem:[%s1186 + $0x10] sm:$0xff]
                %1193 = vst [vmem:[%s1187 + $0x20] sm:$0xff] %v1192
                %v1194 = vld [vmem:[%s1186 + $0x18] sm:$0xff]
                %1195 = vst [vmem:[%s1187 + $0x28] sm:$0xff] %v1194
              $region49: #{_lambda_.3} parent=43 // loop_footer
                %s1185 = sadd.s32 1, %s1181
              $region50: #{_lambda_.3} parent=43 // loop_footer_branch
                %1180 = sbr.rel target = $region46
              $region51: #{_lambda_.3} parent=43 // loop_exit
                _
            $region44: #{_lambda_.3} parent=39 // pred_fallthru
              _
            // Predicated region
            $region52: #{_lambda_.3} parent=39 // pred_check
              _
            $region53: #{_lambda_.3} parent=39 // pred_check_branch
              %1197 = sbr.rel target = $region55
            $region54: #{_lambda_.3} parent=39 // pred_region
              _
            $region55: #{_lambda_.3} parent=39 // pred_fallthru
              _
          $region40: #{_lambda_.3} parent=35 // pred_fallthru
            _
          %1198 = vnop
        $region36: #{_lambda_.3} parent=27 // pred_fallthru
          _
      $region28: #{_lambda_.3} parent=5 // pred_fallthru
        _
      %p1199 = scmp.le.s32.totalorder 2, %s8
      // Predicated region
      $region56: #{_lambda_.3} parent=5 // pred_check
        %p1200 = pneg %p1199
      $region57: #{_lambda_.3} parent=5 // pred_check_branch
        %1202 = sbr.rel (%p1200) target = $region59
      $region58: #{_lambda_.3} parent=5 // pred_region
        %s1203 = ssub.s32 %s8, 2
        // Predicated region
        $region60: #{_lambda_.3} parent=58 // pred_check
          %p1204 = pneg %p101
        $region61: #{_lambda_.3} parent=58 // pred_check_branch
          %1206 = sbr.rel (%p1204) target = $region63
        $region62: #{_lambda_.3} parent=58 // pred_region
          %s1207 = sand.u32 %s86, 1
          %s1208 = sand.u32 %s86, 1
          %s1209 = smul.addr %s1208, 32
          %s1210 = scalar_lea.vmem [#allocation2], %s1209
        $region63: #{_lambda_.3} parent=58 // pred_fallthru
          _
      $region59: #{_lambda_.3} parent=5 // pred_fallthru
        _
    $region6: #{_lambda_.3} parent=1 // loop_footer
      %s12 = sadd.s32 1, %s8
    $region7: #{_lambda_.3} parent=1 // loop_footer_branch
      %7 = sbr.rel target = $region3
    $region8: #{_lambda_.3} parent=1 // loop_exit
      _

</llo_original>
